<compile_context>
chip_gen: v7x
topology: tpu7x:2x2x1
jax: 0.10.0
libtpu: 0.0.40
codegen_flags: <defaults>
</compile_context>

<pallas_src>
import functools

import jax
import jax.numpy as jnp
import numpy as np
from jax import lax
from jax.experimental import pallas as pl
from jax.experimental.pallas import tpu as pltpu


# ------------------------------ Pallas kernel -------------------------------

def _bottleneck_kernel(x_ref, w1_ref, b1_ref, w2_ref, b2_ref,
                       w3_ref, b3_ref, o_ref, im_ref, *, H, W):
    cin = x_ref.shape[-1]
    p = w1_ref.shape[-1]
    cout = w3_ref.shape[-1]

    x2d = x_ref[0].reshape(H * W, cin)                          # bf16

    # ---- stage 1: 1x1 conv (BN scale pre-folded into w1) + bias + ReLU.
    a1 = jnp.dot(x2d, w1_ref[...], preferred_element_type=jnp.float32)
    a1 = jnp.maximum(a1 + b1_ref[...], 0.0)
    a1_3d = a1.reshape(H, W, p).astype(im_ref.dtype)            # bf16

    # ---- stage 1 -> im2col layout for the 3x3 conv.
    # im_ref[i, w, kw*p:(kw+1)*p] = a1 zero-padded by 1 row (i is the padded
    # row index) and shifted by (kw - 1) columns.  Only the halo ring is
    # zeroed each step; the interior is fully overwritten.
    zero_row = jnp.zeros((W, 3 * p), im_ref.dtype)
    zero_col = jnp.zeros((H, 1, p), im_ref.dtype)
    im_ref[0, :, :] = zero_row                                  # top halo row
    im_ref[H + 1, :, :] = zero_row                              # bottom halo
    im_ref[1:H + 1, :, p:2 * p] = a1_3d                         # kw = 1
    im_ref[1:H + 1, 1:W, 0:p] = a1_3d[:, :W - 1, :]             # kw = 0
    im_ref[1:H + 1, 0:1, 0:p] = zero_col                        #   left edge
    im_ref[1:H + 1, 0:W - 1, 2 * p:3 * p] = a1_3d[:, 1:, :]     # kw = 2
    im_ref[1:H + 1, W - 1:W, 2 * p:3 * p] = zero_col            #   right edge

    # ---- stage 2: 3x3 conv (padding=1) as 3 matmuls (K = 3p) accumulated
    # in a local traced f32 value (no VMEM accumulator round-trips).
    acc = None
    for kh in range(3):                                         # short, unrolled
        lhs = im_ref[kh:kh + H].reshape(H * W, 3 * p)
        part = jnp.dot(lhs, w2_ref[kh], preferred_element_type=jnp.float32)
        acc = part if acc is None else acc + part
    a2 = jnp.maximum(acc + b2_ref[...], 0.0).astype(x_ref.dtype)   # bf16 for MXU

    # ---- stage 3: 1x1 conv + bias + identity residual + ReLU.
    a3 = jnp.dot(a2, w3_ref[...], preferred_element_type=jnp.float32)
    a3 = a3 + b3_ref[...] + x2d.astype(jnp.float32)
    o_ref[0] = jnp.maximum(a3, 0.0).reshape(H, W, cout).astype(o_ref.dtype)


# ------------------------------ pallas_call glue ----------------------------

def _vmem_limit_bytes():
    cap = 64 * 1024 * 1024
    try:
        cap = int(getattr(pltpu.get_tpu_info(), "vmem_capacity_bytes", cap))
    except Exception:
        pass
    # ~75% of physical VMEM: ~48 MiB on 64 MiB v7x, ~96 MiB on 128 MiB parts.
    return min(cap * 3 // 4, 100 * 1024 * 1024)


def bottleneck_forward_nhwc(x_nhwc, params):
    """Fused Bottleneck forward, NHWC in / NHWC out (bf16)."""
    N, H, W, cin = x_nhwc.shape
    p = params["w1"].shape[-1]
    cout = params["w3"].shape[-1]
    assert cin == cout, "identity residual requires inplanes == planes * 4"

    # bf16 at the kernel boundary halves HBM traffic; accumulation stays f32.
    x_bf = x_nhwc.astype(jnp.bfloat16)
    # Fold BN scale into the conv output channels, then cast to bf16.
    w1 = (params["w1"] * params["scale1"]).astype(jnp.bfloat16)   # (cin, p)
    w2 = (params["w2"] * params["scale2"]).astype(jnp.bfloat16)   # (3, 3p, p)
    w3 = (params["w3"] * params["scale3"]).astype(jnp.bfloat16)   # (p, cout)
    b1 = params["bias1"].reshape(1, p).astype(jnp.float32)
    b2 = params["bias2"].reshape(1, p).astype(jnp.float32)
    b3 = params["bias3"].reshape(1, cout).astype(jnp.float32)

    flops = 2 * N * H * W * (cin * p + 9 * p * p + p * cout)
    bytes_accessed = (int(x_bf.size) * 2                     # input (bf16)
                      + N * H * W * cout * 2                 # output (bf16)
                      + (int(w1.size) + int(w2.size) + int(w3.size)) * 2
                      + (2 * p + cout) * 4)                  # biases (f32)

    kernel = functools.partial(_bottleneck_kernel, H=H, W=W)
    return pl.pallas_call(
        kernel,
        out_shape=jax.ShapeDtypeStruct((N, H, W, cout), jnp.bfloat16),
        grid=(N,),
        in_specs=[
            pl.BlockSpec((1, H, W, cin), lambda n: (n, 0, 0, 0)),
            pl.BlockSpec((cin, p), lambda n: (0, 0)),
            pl.BlockSpec((1, p), lambda n: (0, 0)),
            pl.BlockSpec((3, 3 * p, p), lambda n: (0, 0, 0)),
            pl.BlockSpec((1, p), lambda n: (0, 0)),
            pl.BlockSpec((p, cout), lambda n: (0, 0)),
            pl.BlockSpec((1, cout), lambda n: (0, 0)),
        ],
        out_specs=pl.BlockSpec((1, H, W, cout), lambda n: (n, 0, 0, 0)),
        scratch_shapes=[
            pltpu.VMEM((H + 2, W, 3 * p), jnp.bfloat16),   # im2col (row-halo)
        ],
        compiler_params=pltpu.CompilerParams(
            dimension_semantics=("parallel",),             # megacore on v7x
            vmem_limit_bytes=_vmem_limit_bytes()),
        cost_estimate=pl.CostEstimate(flops=flops, transcendentals=0,
                                      bytes_accessed=int(bytes_accessed)),
    )(x_bf, w1, b1, w2, b2, w3, b3)


def bottleneck_forward(x_nchw, params, stride=1, downsample=None):
    """NCHW wrapper (PyTorch convention).  NHWC-native pipelines should call
    bottleneck_forward_nhwc directly and avoid both relayout transposes."""
    # TODO(synk): stride != 1 / downsample residual projection not implemented.
    assert stride == 1 and downsample is None, \
        "only stride=1 / downsample=None is implemented"
    x = jnp.transpose(x_nchw, (0, 2, 3, 1))        # NCHW -> NHWC
    out = bottleneck_forward_nhwc(x, params)
    return jnp.transpose(out, (0, 3, 1, 2))        # NHWC -> NCHW


# ------------------------------ reference path ------------------------------

def _bn_nchw(x, gamma, beta, mean, var, eps=1e-5):
    inv = gamma / jnp.sqrt(var + eps)
    return (x - mean[None, :, None, None]) * inv[None, :, None, None] \
        + beta[None, :, None, None]


def ref_bottleneck(x, w1, w2, w3, bn1, bn2, bn3):
    dn = ("NCHW", "OIHW", "NCHW")
    out = lax.conv_general_dilated(x, w1, (1, 1), [(0, 0), (0, 0)],
                                   dimension_numbers=dn)
    out = jax.nn.relu(_bn_nchw(out, *bn1))
    out = lax.conv_general_dilated(out, w2, (1, 1), [(1, 1), (1, 1)],
                                   dimension_numbers=dn)
    out = jax.nn.relu(_bn_nchw(out, *bn2))
    out = lax.conv_general_dilated(out, w3, (1, 1), [(0, 0), (0, 0)],
                                   dimension_numbers=dn)
    out = _bn_nchw(out, *bn3)
    return jax.nn.relu(out + x)


# ------------------------------ parameter setup -----------------------------

def _bn_params(kg, kb, km, kv, c):
    gamma = jax.random.uniform(kg, (c,), jnp.float32, 0.5, 1.5)
    beta = jax.random.normal(kb, (c,), jnp.float32) * 0.1
    mean = jax.random.normal(km, (c,), jnp.float32) * 0.1
    var = jax.random.uniform(kv, (c,), jnp.float32, 0.5, 1.5)
    return gamma, beta, mean, var


def _fuse_bn(gamma, beta, mean, var, eps=1e-5):
    scale = gamma / jnp.sqrt(var + eps)
    bias = beta - mean * scale
    return scale, bias


if __name__ == "__main__":
    N, H, W = 2, 16, 16
    planes = 32
    inplanes = planes * 4      # 128 -> identity residual, lane-dense channels

    keys = jax.random.split(jax.random.PRNGKey(0), 16)
    x = jax.random.normal(keys[0], (N, inplanes, H, W), jnp.float32)

    # Conv weights in PyTorch OIHW layout (bias=False), deterministic init.
    w1_oihw = jax.random.normal(keys[1], (planes, inplanes, 1, 1),
                                jnp.float32) * 0.1
    w2_oihw = jax.random.normal(keys[2], (planes, planes, 3, 3),
                                jnp.float32) * 0.1
    w3_oihw = jax.random.normal(keys[3], (planes * 4, planes, 1, 1),
                                jnp.float32) * 0.1

    bn1 = _bn_params(keys[4], keys[5], keys[6], keys[7], planes)
    bn2 = _bn_params(keys[8], keys[9], keys[10], keys[11], planes)
    bn3 = _bn_params(keys[12], keys[13], keys[14], keys[15], planes * 4)

    s1, b1 = _fuse_bn(*bn1)
    s2, b2 = _fuse_bn(*bn2)
    s3, b3 = _fuse_bn(*bn3)

    params = {
        "w1": w1_oihw[:, :, 0, 0].T,                               # (cin, p)
        # OIHW -> (kh, kw, i, o) -> (kh, kw*i flattened kw-major, o)
        "w2": jnp.transpose(w2_oihw, (2, 3, 1, 0)).reshape(3, 3 * planes,
                                                           planes),
        "w3": w3_oihw[:, :, 0, 0].T,                               # (p, 4p)
        "scale1": s1, "bias1": b1,
        "scale2": s2, "bias2": b2,
        "scale3": s3, "bias3": b3,
    }

    out = jax.block_until_ready(bottleneck_forward(x, params))
    ref = jax.block_until_ready(
        ref_bottleneck(x, w1_oihw, w2_oihw, w3_oihw, bn1, bn2, bn3))

    np.testing.assert_allclose(np.asarray(out.astype(jnp.float32)),
                               np.asarray(ref), rtol=3e-2, atol=3e-2)
    assert out.shape == (N, planes * 4, H, W)
    print("KERNEL_OK")
</pallas_src>

<mosaic_0001>
module attributes {stable_mosaic.version = 11 : i64} {
  func.func @_bottleneck_kernel(%arg0: i32, %arg1: memref<1x16x16x128xbf16, #tpu.memory_space<vmem>>, %arg2: memref<128x32xbf16, #tpu.memory_space<vmem>>, %arg3: memref<1x32xf32, #tpu.memory_space<vmem>>, %arg4: memref<3x96x32xbf16, #tpu.memory_space<vmem>>, %arg5: memref<1x32xf32, #tpu.memory_space<vmem>>, %arg6: memref<32x128xbf16, #tpu.memory_space<vmem>>, %arg7: memref<1x128xf32, #tpu.memory_space<vmem>>, %arg8: memref<1x16x16x128xbf16, #tpu.memory_space<vmem>>, %arg9: memref<18x16x96xbf16, #tpu.memory_space<vmem>>) attributes {dimension_semantics = [#tpu.dimension_semantics<parallel>], iteration_bounds = array<i64: 2>, scalar_prefetch = 0 : i64, scratch_operands = 1 : i64, tpu.core_type = #tpu.core_type<tc>, window_params = [{transform_indices = @transform_0, window_bounds = array<i64: 1, 16, 16, 128>}, {pipeline_mode = #tpu.pipeline_mode<synchronous>, transform_indices = @transform_1, window_bounds = array<i64: 128, 32>}, {pipeline_mode = #tpu.pipeline_mode<synchronous>, transform_indices = @transform_2, window_bounds = array<i64: 1, 32>}, {pipeline_mode = #tpu.pipeline_mode<synchronous>, transform_indices = @transform_3, window_bounds = array<i64: 3, 96, 32>}, {pipeline_mode = #tpu.pipeline_mode<synchronous>, transform_indices = @transform_4, window_bounds = array<i64: 1, 32>}, {pipeline_mode = #tpu.pipeline_mode<synchronous>, transform_indices = @transform_5, window_bounds = array<i64: 32, 128>}, {pipeline_mode = #tpu.pipeline_mode<synchronous>, transform_indices = @transform_6, window_bounds = array<i64: 1, 128>}, {transform_indices = @transform_7, window_bounds = array<i64: 1, 16, 16, 128>}]} {
    %c0 = arith.constant 0 : index
    %c0_0 = arith.constant 0 : index
    %c0_1 = arith.constant 0 : index
    %c0_2 = arith.constant 0 : index
    %0 = vector.load %arg1[%c0, %c0_0, %c0_1, %c0_2] : memref<1x16x16x128xbf16, #tpu.memory_space<vmem>>, vector<1x16x16x128xbf16>
    %1 = vector.shape_cast %0 : vector<1x16x16x128xbf16> to vector<16x16x128xbf16>
    %2 = vector.shape_cast %1 : vector<16x16x128xbf16> to vector<256x128xbf16>
    %c0_3 = arith.constant 0 : index
    %c0_4 = arith.constant 0 : index
    %3 = vector.load %arg2[%c0_3, %c0_4] : memref<128x32xbf16, #tpu.memory_space<vmem>>, vector<128x32xbf16>
    %cst = arith.constant dense<0.000000e+00> : vector<256x32xf32>
    %4 = tpu.matmul %2, %3, %cst {dimension_numbers = #tpu.dot_dimension_numbers<[1], [0], [0], [1], [0, 0, 1, 1], [], []>} : vector<256x128xbf16>, vector<128x32xbf16>, vector<256x32xf32> -> vector<256x32xf32>
    %c0_5 = arith.constant 0 : index
    %c0_6 = arith.constant 0 : index
    %5 = vector.load %arg3[%c0_5, %c0_6] : memref<1x32xf32, #tpu.memory_space<vmem>>, vector<1x32xf32>
    %6 = vector.broadcast %5 : vector<1x32xf32> to vector<256x32xf32>
    %7 = arith.addf %4, %6 : vector<256x32xf32>
    %cst_7 = arith.constant 0.000000e+00 : f32
    %8 = vector.broadcast %cst_7 : f32 to vector<256x32xf32>
    %9 = arith.maximumf %7, %8 : vector<256x32xf32>
    %10 = vector.shape_cast %9 : vector<256x32xf32> to vector<16x16x32xf32>
    %11 = arith.truncf %10 : vector<16x16x32xf32> to vector<16x16x32xbf16>
    %cst_8 = arith.constant 0.000000e+00 : bf16
    %12 = vector.broadcast %cst_8 : bf16 to vector<16x96xbf16>
    %cst_9 = arith.constant 0.000000e+00 : bf16
    %13 = vector.broadcast %cst_9 : bf16 to vector<16x1x32xbf16>
    %c0_10 = arith.constant 0 : index
    %c0_11 = arith.constant 0 : index
    %c0_12 = arith.constant 0 : index
    %14 = vector.load %arg9[%c0_10, %c0_11, %c0_12] : memref<18x16x96xbf16, #tpu.memory_space<vmem>>, vector<1x16x96xbf16>
    %15 = vector.shape_cast %14 : vector<1x16x96xbf16> to vector<16x96xbf16>
    %16 = vector.shape_cast %12 : vector<16x96xbf16> to vector<1x16x96xbf16>
    tpu.vector_store %arg9[%c0_10, %c0_11, %c0_12], %16 {strides = array<i32>} : memref<18x16x96xbf16, #tpu.memory_space<vmem>>, vector<1x16x96xbf16>,
    %c17 = arith.constant 17 : index
    %c0_13 = arith.constant 0 : index
    %c0_14 = arith.constant 0 : index
    %17 = vector.load %arg9[%c17, %c0_13, %c0_14] : memref<18x16x96xbf16, #tpu.memory_space<vmem>>, vector<1x16x96xbf16>
    %18 = vector.shape_cast %17 : vector<1x16x96xbf16> to vector<16x96xbf16>
    %19 = vector.shape_cast %12 : vector<16x96xbf16> to vector<1x16x96xbf16>
    tpu.vector_store %arg9[%c17, %c0_13, %c0_14], %19 {strides = array<i32>} : memref<18x16x96xbf16, #tpu.memory_space<vmem>>, vector<1x16x96xbf16>,
    %c1 = arith.constant 1 : index
    %c0_15 = arith.constant 0 : index
    %c32 = arith.constant 32 : index
    %20 = vector.load %arg9[%c1, %c0_15, %c32] : memref<18x16x96xbf16, #tpu.memory_space<vmem>>, vector<16x16x32xbf16>
    tpu.vector_store %arg9[%c1, %c0_15, %c32], %11 {strides = array<i32>} : memref<18x16x96xbf16, #tpu.memory_space<vmem>>, vector<16x16x32xbf16>,
    %21 = vector.extract_strided_slice %11 {offsets = [0, 0, 0], sizes = [16, 15, 32], strides = [1, 1, 1]} : vector<16x16x32xbf16> to vector<16x15x32xbf16>
    %c1_16 = arith.constant 1 : index
    %c1_17 = arith.constant 1 : index
    %c0_18 = arith.constant 0 : index
    %22 = vector.load %arg9[%c1_16, %c1_17, %c0_18] : memref<18x16x96xbf16, #tpu.memory_space<vmem>>, vector<16x15x32xbf16>
    tpu.vector_store %arg9[%c1_16, %c1_17, %c0_18], %21 {strides = array<i32>} : memref<18x16x96xbf16, #tpu.memory_space<vmem>>, vector<16x15x32xbf16>,
    %c1_19 = arith.constant 1 : index
    %c0_20 = arith.constant 0 : index
    %c0_21 = arith.constant 0 : index
    %23 = vector.load %arg9[%c1_19, %c0_20, %c0_21] : memref<18x16x96xbf16, #tpu.memory_space<vmem>>, vector<16x1x32xbf16>
    tpu.vector_store %arg9[%c1_19, %c0_20, %c0_21], %13 {strides = array<i32>} : memref<18x16x96xbf16, #tpu.memory_space<vmem>>, vector<16x1x32xbf16>,
    %24 = vector.extract_strided_slice %11 {offsets = [0, 1, 0], sizes = [16, 15, 32], strides = [1, 1, 1]} : vector<16x16x32xbf16> to vector<16x15x32xbf16>
    %c1_22 = arith.constant 1 : index
    %c0_23 = arith.constant 0 : index
    %c64 = arith.constant 64 : index
    %25 = vector.load %arg9[%c1_22, %c0_23, %c64] : memref<18x16x96xbf16, #tpu.memory_space<vmem>>, vector<16x15x32xbf16>
    tpu.vector_store %arg9[%c1_22, %c0_23, %c64], %24 {strides = array<i32>} : memref<18x16x96xbf16, #tpu.memory_space<vmem>>, vector<16x15x32xbf16>,
    %c1_24 = arith.constant 1 : index
    %c15 = arith.constant 15 : index
    %c64_25 = arith.constant 64 : index
    %26 = vector.load %arg9[%c1_24, %c15, %c64_25] : memref<18x16x96xbf16, #tpu.memory_space<vmem>>, vector<16x1x32xbf16>
    tpu.vector_store %arg9[%c1_24, %c15, %c64_25], %13 {strides = array<i32>} : memref<18x16x96xbf16, #tpu.memory_space<vmem>>, vector<16x1x32xbf16>,
    %c0_26 = arith.constant 0 : index
    %c0_27 = arith.constant 0 : index
    %c0_28 = arith.constant 0 : index
    %27 = vector.load %arg9[%c0_26, %c0_27, %c0_28] : memref<18x16x96xbf16, #tpu.memory_space<vmem>>, vector<16x16x96xbf16>
    %28 = vector.shape_cast %27 : vector<16x16x96xbf16> to vector<256x96xbf16>
    %c0_29 = arith.constant 0 : index
    %c0_30 = arith.constant 0 : index
    %c0_31 = arith.constant 0 : index
    %29 = vector.load %arg4[%c0_29, %c0_30, %c0_31] : memref<3x96x32xbf16, #tpu.memory_space<vmem>>, vector<1x96x32xbf16>
    %30 = vector.shape_cast %29 : vector<1x96x32xbf16> to vector<96x32xbf16>
    %cst_32 = arith.constant dense<0.000000e+00> : vector<256x32xf32>
    %31 = tpu.matmul %28, %30, %cst_32 {dimension_numbers = #tpu.dot_dimension_numbers<[1], [0], [0], [1], [0, 0, 1, 1], [], []>} : vector<256x96xbf16>, vector<96x32xbf16>, vector<256x32xf32> -> vector<256x32xf32>
    %c1_33 = arith.constant 1 : index
    %c0_34 = arith.constant 0 : index
    %c0_35 = arith.constant 0 : index
    %32 = vector.load %arg9[%c1_33, %c0_34, %c0_35] : memref<18x16x96xbf16, #tpu.memory_space<vmem>>, vector<16x16x96xbf16>
    %33 = vector.shape_cast %32 : vector<16x16x96xbf16> to vector<256x96xbf16>
    %c1_36 = arith.constant 1 : index
    %c0_37 = arith.constant 0 : index
    %c0_38 = arith.constant 0 : index
    %34 = vector.load %arg4[%c1_36, %c0_37, %c0_38] : memref<3x96x32xbf16, #tpu.memory_space<vmem>>, vector<1x96x32xbf16>
    %35 = vector.shape_cast %34 : vector<1x96x32xbf16> to vector<96x32xbf16>
    %cst_39 = arith.constant dense<0.000000e+00> : vector<256x32xf32>
    %36 = tpu.matmul %33, %35, %cst_39 {dimension_numbers = #tpu.dot_dimension_numbers<[1], [0], [0], [1], [0, 0, 1, 1], [], []>} : vector<256x96xbf16>, vector<96x32xbf16>, vector<256x32xf32> -> vector<256x32xf32>
    %37 = arith.addf %31, %36 : vector<256x32xf32>
    %c2 = arith.constant 2 : index
    %c0_40 = arith.constant 0 : index
    %c0_41 = arith.constant 0 : index
    %38 = vector.load %arg9[%c2, %c0_40, %c0_41] : memref<18x16x96xbf16, #tpu.memory_space<vmem>>, vector<16x16x96xbf16>
    %39 = vector.shape_cast %38 : vector<16x16x96xbf16> to vector<256x96xbf16>
    %c2_42 = arith.constant 2 : index
    %c0_43 = arith.constant 0 : index
    %c0_44 = arith.constant 0 : index
    %40 = vector.load %arg4[%c2_42, %c0_43, %c0_44] : memref<3x96x32xbf16, #tpu.memory_space<vmem>>, vector<1x96x32xbf16>
    %41 = vector.shape_cast %40 : vector<1x96x32xbf16> to vector<96x32xbf16>
    %cst_45 = arith.constant dense<0.000000e+00> : vector<256x32xf32>
    %42 = tpu.matmul %39, %41, %cst_45 {dimension_numbers = #tpu.dot_dimension_numbers<[1], [0], [0], [1], [0, 0, 1, 1], [], []>} : vector<256x96xbf16>, vector<96x32xbf16>, vector<256x32xf32> -> vector<256x32xf32>
    %43 = arith.addf %37, %42 : vector<256x32xf32>
    %c0_46 = arith.constant 0 : index
    %c0_47 = arith.constant 0 : index
    %44 = vector.load %arg5[%c0_46, %c0_47] : memref<1x32xf32, #tpu.memory_space<vmem>>, vector<1x32xf32>
    %45 = vector.broadcast %44 : vector<1x32xf32> to vector<256x32xf32>
    %46 = arith.addf %43, %45 : vector<256x32xf32>
    %cst_48 = arith.constant 0.000000e+00 : f32
    %47 = vector.broadcast %cst_48 : f32 to vector<256x32xf32>
    %48 = arith.maximumf %46, %47 : vector<256x32xf32>
    %49 = arith.truncf %48 : vector<256x32xf32> to vector<256x32xbf16>
    %c0_49 = arith.constant 0 : index
    %c0_50 = arith.constant 0 : index
    %50 = vector.load %arg6[%c0_49, %c0_50] : memref<32x128xbf16, #tpu.memory_space<vmem>>, vector<32x128xbf16>
    %cst_51 = arith.constant dense<0.000000e+00> : vector<256x128xf32>
    %51 = tpu.matmul %49, %50, %cst_51 {dimension_numbers = #tpu.dot_dimension_numbers<[1], [0], [0], [1], [0, 0, 1, 1], [], []>} : vector<256x32xbf16>, vector<32x128xbf16>, vector<256x128xf32> -> vector<256x128xf32>
    %c0_52 = arith.constant 0 : index
    %c0_53 = arith.constant 0 : index
    %52 = vector.load %arg7[%c0_52, %c0_53] : memref<1x128xf32, #tpu.memory_space<vmem>>, vector<1x128xf32>
    %53 = vector.broadcast %52 : vector<1x128xf32> to vector<256x128xf32>
    %54 = arith.addf %51, %53 : vector<256x128xf32>
    %55 = arith.extf %2 : vector<256x128xbf16> to vector<256x128xf32>
    %56 = arith.addf %54, %55 : vector<256x128xf32>
    %cst_54 = arith.constant 0.000000e+00 : f32
    %57 = vector.broadcast %cst_54 : f32 to vector<256x128xf32>
    %58 = arith.maximumf %56, %57 : vector<256x128xf32>
    %59 = vector.shape_cast %58 : vector<256x128xf32> to vector<16x16x128xf32>
    %60 = arith.truncf %59 : vector<16x16x128xf32> to vector<16x16x128xbf16>
    %c0_55 = arith.constant 0 : index
    %c0_56 = arith.constant 0 : index
    %c0_57 = arith.constant 0 : index
    %c0_58 = arith.constant 0 : index
    %61 = vector.load %arg8[%c0_55, %c0_56, %c0_57, %c0_58] : memref<1x16x16x128xbf16, #tpu.memory_space<vmem>>, vector<1x16x16x128xbf16>
    %62 = vector.shape_cast %61 : vector<1x16x16x128xbf16> to vector<16x16x128xbf16>
    %63 = vector.shape_cast %60 : vector<16x16x128xbf16> to vector<1x16x16x128xbf16>
    tpu.vector_store %arg8[%c0_55, %c0_56, %c0_57, %c0_58], %63 {strides = array<i32>} : memref<1x16x16x128xbf16, #tpu.memory_space<vmem>>, vector<1x16x16x128xbf16>,
    return
  }
  func.func @transform_0(%arg0: i32) -> (i32, i32, i32, i32) {
    %c0_i32 = arith.constant 0 : i32
    %c0_i32_0 = arith.constant 0 : i32
    %c0_i32_1 = arith.constant 0 : i32
    %c0_i32_2 = arith.constant 0 : i32
    return %arg0, %c0_i32, %c0_i32_0, %c0_i32_1 : i32, i32, i32, i32
  }
  func.func @transform_1(%arg0: i32) -> (i32, i32) {
    %c0_i32 = arith.constant 0 : i32
    %c0_i32_0 = arith.constant 0 : i32
    %c0_i32_1 = arith.constant 0 : i32
    return %c0_i32, %c0_i32_0 : i32, i32
  }
  func.func @transform_2(%arg0: i32) -> (i32, i32) {
    %c0_i32 = arith.constant 0 : i32
    %c0_i32_0 = arith.constant 0 : i32
    %c0_i32_1 = arith.constant 0 : i32
    return %c0_i32, %c0_i32_0 : i32, i32
  }
  func.func @transform_3(%arg0: i32) -> (i32, i32, i32) {
    %c0_i32 = arith.constant 0 : i32
    %c0_i32_0 = arith.constant 0 : i32
    %c0_i32_1 = arith.constant 0 : i32
    %c0_i32_2 = arith.constant 0 : i32
    return %c0_i32, %c0_i32_0, %c0_i32_1 : i32, i32, i32
  }
  func.func @transform_4(%arg0: i32) -> (i32, i32) {
    %c0_i32 = arith.constant 0 : i32
    %c0_i32_0 = arith.constant 0 : i32
    %c0_i32_1 = arith.constant 0 : i32
    return %c0_i32, %c0_i32_0 : i32, i32
  }
  func.func @transform_5(%arg0: i32) -> (i32, i32) {
    %c0_i32 = arith.constant 0 : i32
    %c0_i32_0 = arith.constant 0 : i32
    %c0_i32_1 = arith.constant 0 : i32
    return %c0_i32, %c0_i32_0 : i32, i32
  }
  func.func @transform_6(%arg0: i32) -> (i32, i32) {
    %c0_i32 = arith.constant 0 : i32
    %c0_i32_0 = arith.constant 0 : i32
    %c0_i32_1 = arith.constant 0 : i32
    return %c0_i32, %c0_i32_0 : i32, i32
  }
  func.func @transform_7(%arg0: i32) -> (i32, i32, i32, i32) {
    %c0_i32 = arith.constant 0 : i32
    %c0_i32_0 = arith.constant 0 : i32
    %c0_i32_1 = arith.constant 0 : i32
    %c0_i32_2 = arith.constant 0 : i32
    return %arg0, %c0_i32, %c0_i32_0, %c0_i32_1 : i32, i32, i32, i32
  }
}

</mosaic_0001>

<llo_original>
// kernel: tpu_custom_call.1
$region0: #{tpu_custom_call.1}
  #allocation0 [shape = 'u32[]', space=smem, size = 0x4, offset = 0x4, fixed_abs, tag = 'smem constant byte address 0x4 - core index']
  #allocation1 [shape = 'u32[144,128]{1,0:T(1,128)}', space=vmem, size = 0x12000, scoped, tag = 'internal scratch']
  #allocation2 [shape = 'bf16[18,16,96]{2,1,0:T(16,128)(2,1)}', space=vmem, size = 0x12000, scoped, tag = 'scratch operand']
  %s0 = inlined_call_operand.vmem [shape: bf16[2,16,16,128], index: 0, kind: input, shape index: {}]
  %s1 = inlined_call_operand.vmem [shape: bf16[128,32], index: 1, kind: input, shape index: {}]
  %s2 = inlined_call_operand.vmem [shape: f32[1,32], index: 2, kind: input, shape index: {}]
  %s3 = inlined_call_operand.vmem [shape: bf16[3,96,32], index: 3, kind: input, shape index: {}]
  %s4 = inlined_call_operand.vmem [shape: f32[1,32], index: 4, kind: input, shape index: {}]
  %s5 = inlined_call_operand.vmem [shape: bf16[32,128], index: 5, kind: input, shape index: {}]
  %s6 = inlined_call_operand.vmem [shape: f32[1,128], index: 6, kind: input, shape index: {}]
  %s7 = inlined_call_operand.hbm [shape: bf16[2,16,16,128], index: 7, kind: output, shape index: {}]
  %s8 = sld [smem:[#allocation0]]
  $region61: #{tpu_custom_call.1} parent=0
    _
  %s10 = ssub.s32 1, %s8
  %s11 = scalar_select 0, %s10, %s8
  $region1: #{tpu_custom_call.1} parent=0
    #allocation3 [shape = 'u8[131072]{0}', space=vmem, size = 0x20000, scoped, tag = 'output window, operand 0']
    #allocation4 [shape = 's32[2]{0}', space=sflag, size = 0x8, scoped, tag = 'scoped memory for tpu_custom_call.1']
    %12 = vsyncpa [#allocation4], 0
    %s13 = scalar_lea.sflag [#allocation4], 1
    %14 = vsyncpa %s13, 0
    loop: start=0, step=1, limit=4
    $region2: #{tpu_custom_call.1} parent=1 // loop_pre_header
      _
    $region3: #{tpu_custom_call.1} parent=1 // loop_header
      %s16 = sphi 0, %s20
      %p17 = scmp.ge.s32.totalorder %s16, 4
      %s26 = sphi 0, %s28
      %s29 = sphi 0, %s26
      %s30 = sphi 0, %s29
      %s46 = sphi 0, %s30
      %s50 = sphi 0, %s50
      %s52 = sphi 0, %s50
      %s53 = sphi 0, %s52
      %s67 = sphi 0, %s53
      %s71 = sphi 0, %s71
      %s73 = sphi 0, %s71
      %s74 = sphi 0, %s73
      %s88 = sphi 0, %s74
      %s92 = sphi 0, %s92
      %s94 = sphi 0, %s92
      %s95 = sphi 0, %s94
      %s109 = sphi 0, %s95
      %s113 = sphi 0, %s113
      %s115 = sphi 0, %s113
      %s116 = sphi 0, %s115
      %s130 = sphi 0, %s116
      %s134 = sphi 0, %s134
      %s136 = sphi 0, %s134
      %s137 = sphi 0, %s136
      %s151 = sphi 0, %s137
      %s155 = sphi 0, %s155
      %s157 = sphi 0, %s155
      %s158 = sphi 0, %s157
      %s172 = sphi 0, %s158
      %s178 = sphi 0, %s180
      %s181 = sphi 0, %s178
      %s182 = sphi 0, %s181
      %s198 = sphi 0, %s182
    $region4: #{tpu_custom_call.1} parent=1 // loop_header_branch
      %19 = sbr.rel (%p17) target = $region8
    $region5: #{tpu_custom_call.1} parent=1 // loop_body
      %s21 = ssub.s32 %s16, 1
      %s22 = ssub.s32 %s16, 2
      %s23 = sadd.s32 %s16, 1
      %s24 = ssub.s32 %s16, %s23
      %p25 = scmp.eq.s32.totalorder %s24, 0
      %s27 = sadd.s32 %s26, 1
      %s28 = scalar_select %p25, %s26, %s27
      %p31 = pneg %p25
      %p32 = scmp.eq.s32.totalorder %s16, 1
      %p33 = por %p31, %p32
      %p34 = scmp.ne.s32.totalorder %s26, %s29
      %p35 = scmp.eq.s32.totalorder %s16, 0
      %p36 = por %p34, %p35
      %p37 = scmp.ne.s32.totalorder %s26, %s29
      %p38 = scmp.eq.s32.totalorder %s21, 1
      %p39 = por %p37, %p38
      %p40 = scmp.ne.s32.totalorder %s29, %s30
      %p41 = scmp.eq.s32.totalorder %s21, 0
      %p42 = por %p40, %p41
      %p43 = scmp.ne.s32.totalorder %s29, %s30
      %p44 = scmp.eq.s32.totalorder %s22, 1
      %p45 = por %p43, %p44
      %p47 = scmp.ne.s32.totalorder %s30, %s46
      %p48 = scmp.eq.s32.totalorder %s22, 0
      %p49 = por %p47, %p48
      %s51 = sadd.s32 %s50, 1
      %p54 = scmp.eq.s32.totalorder %s16, 1
      %p55 = scmp.ne.s32.totalorder %s50, %s52
      %p56 = scmp.eq.s32.totalorder %s16, 0
      %p57 = por %p55, %p56
      %p58 = scmp.ne.s32.totalorder %s50, %s52
      %p59 = scmp.eq.s32.totalorder %s21, 1
      %p60 = por %p58, %p59
      %p61 = scmp.ne.s32.totalorder %s52, %s53
      %p62 = scmp.eq.s32.totalorder %s21, 0
      %p63 = por %p61, %p62
      %p64 = scmp.ne.s32.totalorder %s52, %s53
      %p65 = scmp.eq.s32.totalorder %s22, 1
      %p66 = por %p64, %p65
      %p68 = scmp.ne.s32.totalorder %s53, %s67
      %p69 = scmp.eq.s32.totalorder %s22, 0
      %p70 = por %p68, %p69
      %s72 = sadd.s32 %s71, 1
      %p75 = scmp.eq.s32.totalorder %s16, 1
      %p76 = scmp.ne.s32.totalorder %s71, %s73
      %p77 = scmp.eq.s32.totalorder %s16, 0
      %p78 = por %p76, %p77
      %p79 = scmp.ne.s32.totalorder %s71, %s73
      %p80 = scmp.eq.s32.totalorder %s21, 1
      %p81 = por %p79, %p80
      %p82 = scmp.ne.s32.totalorder %s73, %s74
      %p83 = scmp.eq.s32.totalorder %s21, 0
      %p84 = por %p82, %p83
      %p85 = scmp.ne.s32.totalorder %s73, %s74
      %p86 = scmp.eq.s32.totalorder %s22, 1
      %p87 = por %p85, %p86
      %p89 = scmp.ne.s32.totalorder %s74, %s88
      %p90 = scmp.eq.s32.totalorder %s22, 0
      %p91 = por %p89, %p90
      %s93 = sadd.s32 %s92, 1
      %p96 = scmp.eq.s32.totalorder %s16, 1
      %p97 = scmp.ne.s32.totalorder %s92, %s94
      %p98 = scmp.eq.s32.totalorder %s16, 0
      %p99 = por %p97, %p98
      %p100 = scmp.ne.s32.totalorder %s92, %s94
      %p101 = scmp.eq.s32.totalorder %s21, 1
      %p102 = por %p100, %p101
      %p103 = scmp.ne.s32.totalorder %s94, %s95
      %p104 = scmp.eq.s32.totalorder %s21, 0
      %p105 = por %p103, %p104
      %p106 = scmp.ne.s32.totalorder %s94, %s95
      %p107 = scmp.eq.s32.totalorder %s22, 1
      %p108 = por %p106, %p107
      %p110 = scmp.ne.s32.totalorder %s95, %s109
      %p111 = scmp.eq.s32.totalorder %s22, 0
      %p112 = por %p110, %p111
      %s114 = sadd.s32 %s113, 1
      %p117 = scmp.eq.s32.totalorder %s16, 1
      %p118 = scmp.ne.s32.totalorder %s113, %s115
      %p119 = scmp.eq.s32.totalorder %s16, 0
      %p120 = por %p118, %p119
      %p121 = scmp.ne.s32.totalorder %s113, %s115
      %p122 = scmp.eq.s32.totalorder %s21, 1
      %p123 = por %p121, %p122
      %p124 = scmp.ne.s32.totalorder %s115, %s116
      %p125 = scmp.eq.s32.totalorder %s21, 0
      %p126 = por %p124, %p125
      %p127 = scmp.ne.s32.totalorder %s115, %s116
      %p128 = scmp.eq.s32.totalorder %s22, 1
      %p129 = por %p127, %p128
      %p131 = scmp.ne.s32.totalorder %s116, %s130
      %p132 = scmp.eq.s32.totalorder %s22, 0
      %p133 = por %p131, %p132
      %s135 = sadd.s32 %s134, 1
      %p138 = scmp.eq.s32.totalorder %s16, 1
      %p139 = scmp.ne.s32.totalorder %s134, %s136
      %p140 = scmp.eq.s32.totalorder %s16, 0
      %p141 = por %p139, %p140
      %p142 = scmp.ne.s32.totalorder %s134, %s136
      %p143 = scmp.eq.s32.totalorder %s21, 1
      %p144 = por %p142, %p143
      %p145 = scmp.ne.s32.totalorder %s136, %s137
      %p146 = scmp.eq.s32.totalorder %s21, 0
      %p147 = por %p145, %p146
      %p148 = scmp.ne.s32.totalorder %s136, %s137
      %p149 = scmp.eq.s32.totalorder %s22, 1
      %p150 = por %p148, %p149
      %p152 = scmp.ne.s32.totalorder %s137, %s151
      %p153 = scmp.eq.s32.totalorder %s22, 0
      %p154 = por %p152, %p153
      %s156 = sadd.s32 %s155, 1
      %p159 = scmp.eq.s32.totalorder %s16, 1
      %p160 = scmp.ne.s32.totalorder %s155, %s157
      %p161 = scmp.eq.s32.totalorder %s16, 0
      %p162 = por %p160, %p161
      %p163 = scmp.ne.s32.totalorder %s155, %s157
      %p164 = scmp.eq.s32.totalorder %s21, 1
      %p165 = por %p163, %p164
      %p166 = scmp.ne.s32.totalorder %s157, %s158
      %p167 = scmp.eq.s32.totalorder %s21, 0
      %p168 = por %p166, %p167
      %p169 = scmp.ne.s32.totalorder %s157, %s158
      %p170 = scmp.eq.s32.totalorder %s22, 1
      %p171 = por %p169, %p170
      %p173 = scmp.ne.s32.totalorder %s158, %s172
      %p174 = scmp.eq.s32.totalorder %s22, 0
      %p175 = por %p173, %p174
      %s176 = ssub.s32 %s16, %s23
      %p177 = scmp.eq.s32.totalorder %s176, 0
      %s179 = sadd.s32 %s178, 1
      %s180 = scalar_select %p177, %s178, %s179
      %p183 = pneg %p177
      %p184 = scmp.eq.s32.totalorder %s16, 1
      %p185 = por %p183, %p184
      %p186 = scmp.ne.s32.totalorder %s178, %s181
      %p187 = scmp.eq.s32.totalorder %s16, 0
      %p188 = por %p186, %p187
      %p189 = scmp.ne.s32.totalorder %s178, %s181
      %p190 = scmp.eq.s32.totalorder %s21, 1
      %p191 = por %p189, %p190
      %p192 = scmp.ne.s32.totalorder %s181, %s182
      %p193 = scmp.eq.s32.totalorder %s21, 0
      %p194 = por %p192, %p193
      %p195 = scmp.ne.s32.totalorder %s181, %s182
      %p196 = scmp.eq.s32.totalorder %s22, 1
      %p197 = por %p195, %p196
      %p199 = scmp.ne.s32.totalorder %s182, %s198
      %p200 = scmp.eq.s32.totalorder %s22, 0
      %p201 = por %p199, %p200
      %p202 = scmp.le.s32.totalorder 1, %s16
      %p203 = scmp.lt.s32.totalorder %s16, 3
      %p204 = pnand %p202, %p203
      %p205 = pneg %p204
      // Predicated region
      $region9: #{tpu_custom_call.1} parent=5 // pred_check
        _
      $region10: #{tpu_custom_call.1} parent=5 // pred_check_branch
        %207 = sbr.rel (%p204) target = $region12
      $region11: #{tpu_custom_call.1} parent=5 // pred_region
        %s208 = ssub.s32 %s16, 1
        // Predicated region
        $region13: #{tpu_custom_call.1} parent=11 // pred_check
          %p209 = pneg %p63
        $region14: #{tpu_custom_call.1} parent=11 // pred_check_branch
          %211 = sbr.rel (%p209) target = $region16
        $region15: #{tpu_custom_call.1} parent=11 // pred_region
          _
        $region16: #{tpu_custom_call.1} parent=11 // pred_fallthru
          _
        // Predicated region
        $region17: #{tpu_custom_call.1} parent=11 // pred_check
          %p212 = pneg %p84
        $region18: #{tpu_custom_call.1} parent=11 // pred_check_branch
          %214 = sbr.rel (%p212) target = $region20
        $region19: #{tpu_custom_call.1} parent=11 // pred_region
          _
        $region20: #{tpu_custom_call.1} parent=11 // pred_fallthru
          _
        // Predicated region
        $region21: #{tpu_custom_call.1} parent=11 // pred_check
          %p215 = pneg %p105
        $region22: #{tpu_custom_call.1} parent=11 // pred_check_branch
          %217 = sbr.rel (%p215) target = $region24
        $region23: #{tpu_custom_call.1} parent=11 // pred_region
          _
        $region24: #{tpu_custom_call.1} parent=11 // pred_fallthru
          _
        // Predicated region
        $region25: #{tpu_custom_call.1} parent=11 // pred_check
          %p218 = pneg %p126
        $region26: #{tpu_custom_call.1} parent=11 // pred_check_branch
          %220 = sbr.rel (%p218) target = $region28
        $region27: #{tpu_custom_call.1} parent=11 // pred_region
          _
        $region28: #{tpu_custom_call.1} parent=11 // pred_fallthru
          _
        // Predicated region
        $region29: #{tpu_custom_call.1} parent=11 // pred_check
          %p221 = pneg %p147
        $region30: #{tpu_custom_call.1} parent=11 // pred_check_branch
          %223 = sbr.rel (%p221) target = $region32
        $region31: #{tpu_custom_call.1} parent=11 // pred_region
          _
        $region32: #{tpu_custom_call.1} parent=11 // pred_fallthru
          _
        // Predicated region
        $region33: #{tpu_custom_call.1} parent=11 // pred_check
          %p224 = pneg %p168
        $region34: #{tpu_custom_call.1} parent=11 // pred_check_branch
          %226 = sbr.rel (%p224) target = $region36
        $region35: #{tpu_custom_call.1} parent=11 // pred_region
          _
        $region36: #{tpu_custom_call.1} parent=11 // pred_fallthru
          _
      $region12: #{tpu_custom_call.1} parent=5 // pred_fallthru
        _
      %p227 = scmp.lt.s32.totalorder %s16, 2
      // Predicated region
      $region37: #{tpu_custom_call.1} parent=5 // pred_check
        %p228 = pneg %p227
      $region38: #{tpu_custom_call.1} parent=5 // pred_check_branch
        %230 = sbr.rel (%p228) target = $region40
      $region39: #{tpu_custom_call.1} parent=5 // pred_region
        // Predicated region
        $region41: #{tpu_custom_call.1} parent=39 // pred_check
          %p231 = pneg %p36
        $region42: #{tpu_custom_call.1} parent=39 // pred_check_branch
          %233 = sbr.rel (%p231) target = $region44
        $region43: #{tpu_custom_call.1} parent=39 // pred_region
          %p234 = scmp.lt.s32.totalorder %s16, 1
          %s235 = scalar_select %p234, %s16, 1
          %s236 = smul.addr %s235, 32
          %s237 = smul.addr %s236, 4
          %s238 = scalar_lea.vmem %s0, %s237
        $region44: #{tpu_custom_call.1} parent=39 // pred_fallthru
          _
      $region40: #{tpu_custom_call.1} parent=5 // pred_fallthru
        _
      %p239 = scmp.le.s32.totalorder 1, %s16
      %p240 = scmp.lt.s32.totalorder %s16, 3
      %p241 = pnand %p239, %p240
      %p242 = pneg %p241
      // Predicated region
      $region45: #{tpu_custom_call.1} parent=5 // pred_check
        _
      $region46: #{tpu_custom_call.1} parent=5 // pred_check_branch
        %244 = sbr.rel (%p241) target = $region48
      $region47: #{tpu_custom_call.1} parent=5 // pred_region
        %s245 = ssub.s32 %s16, 1
        %p246 = scmp.lt.s32.totalorder %s21, 1
        %s247 = scalar_select %p246, %s21, 1
        %s248 = smul.addr %s247, 32
        %s249 = smul.addr %s248, 4
        %s250 = scalar_lea.vmem %s0, %s249
        %p251 = pneg %p42
        %p252 = pneg %p39
        %p253 = pneg %p63
        %p254 = pneg %p60
        %p255 = pneg %p84
        %p256 = pneg %p81
        %p257 = pneg %p105
        %p258 = pneg %p102
        %p259 = pneg %p126
        %p260 = pneg %p123
        %p261 = pneg %p147
        %p262 = pneg %p144
        %p263 = pneg %p168
        %p264 = pneg %p165
        %p265 = pneg %p194
        %p266 = pneg %p191
        %s267 = sand.u32 %s181, 1
        %s268 = scalar_lea.sflag [#allocation4], %s267
        %s269 = sand.u32 %s181, 1
        %s270 = smul.addr %s269, 128
        %s271 = scalar_lea.vmem [#allocation3], %s270
        %p272 = scmp.lt.s32.totalorder %s21, 1
        %s273 = scalar_select %p272, %s21, 1
        %s274 = smul.addr %s273, 32
        %s275 = smul.addr %s274, 4
        %s276 = scalar_lea.vmem %s0, %s275
        %v278 = vld [vmem:[%s276] sm:$0xf]
        %v279 = vld [vmem:[%s276 + $0x4] sm:$0xf]
        %v280 = vld [vmem:[%s276 + $0x8] sm:$0xf]
        %v281 = vld [vmem:[%s276 + $0xc] sm:$0xf]
        %v282 = vld [vmem:[%s276 + $0x10] sm:$0xf]
        %v283 = vld [vmem:[%s276 + $0x14] sm:$0xf]
        %v284 = vld [vmem:[%s276 + $0x18] sm:$0xf]
        %v285 = vld [vmem:[%s276 + $0x1c] sm:$0xf]
        %v286 = vld [vmem:[%s276 + $0x20] sm:$0xf]
        %v287 = vld [vmem:[%s276 + $0x24] sm:$0xf]
        %v288 = vld [vmem:[%s276 + $0x28] sm:$0xf]
        %v289 = vld [vmem:[%s276 + $0x2c] sm:$0xf]
        %v290 = vld [vmem:[%s276 + $0x30] sm:$0xf]
        %v291 = vld [vmem:[%s276 + $0x34] sm:$0xf]
        %v292 = vld [vmem:[%s276 + $0x38] sm:$0xf]
        %v293 = vld [vmem:[%s276 + $0x3c] sm:$0xf]
        %v294 = vld [vmem:[%s276 + $0x40] sm:$0xf]
        %v295 = vld [vmem:[%s276 + $0x44] sm:$0xf]
        %v296 = vld [vmem:[%s276 + $0x48] sm:$0xf]
        %v297 = vld [vmem:[%s276 + $0x4c] sm:$0xf]
        %v298 = vld [vmem:[%s276 + $0x50] sm:$0xf]
        %v299 = vld [vmem:[%s276 + $0x54] sm:$0xf]
        %v300 = vld [vmem:[%s276 + $0x58] sm:$0xf]
        %v301 = vld [vmem:[%s276 + $0x5c] sm:$0xf]
        %v302 = vld [vmem:[%s276 + $0x60] sm:$0xf]
        %v303 = vld [vmem:[%s276 + $0x64] sm:$0xf]
        %v304 = vld [vmem:[%s276 + $0x68] sm:$0xf]
        %v305 = vld [vmem:[%s276 + $0x6c] sm:$0xf]
        %v306 = vld [vmem:[%s276 + $0x70] sm:$0xf]
        %v307 = vld [vmem:[%s276 + $0x74] sm:$0xf]
        %v308 = vld [vmem:[%s276 + $0x78] sm:$0xf]
        %v309 = vld [vmem:[%s276 + $0x7c] sm:$0xf]
        %v310 = vld [vmem:[%s1] sm:$0xf]
        %v311 = vld [vmem:[%s1 + $0x4] sm:$0xf]
        %v312 = vld [vmem:[%s1 + $0x8] sm:$0xf]
        %v313 = vld [vmem:[%s1 + $0xc] sm:$0xf]
        %v314 = vld [vmem:[%s1 + $0x10] sm:$0xf]
        %v315 = vld [vmem:[%s1 + $0x14] sm:$0xf]
        %v316 = vld [vmem:[%s1 + $0x18] sm:$0xf]
        %v317 = vld [vmem:[%s1 + $0x1c] sm:$0xf]
        %v318 = vld [vmem:[%s1 + $0x20] sm:$0xf]
        %v319 = vld [vmem:[%s1 + $0x24] sm:$0xf]
        %v320 = vld [vmem:[%s1 + $0x28] sm:$0xf]
        %v321 = vld [vmem:[%s1 + $0x2c] sm:$0xf]
        %v322 = vld [vmem:[%s1 + $0x30] sm:$0xf]
        %v323 = vld [vmem:[%s1 + $0x34] sm:$0xf]
        %v324 = vld [vmem:[%s1 + $0x38] sm:$0xf]
        %v325 = vld [vmem:[%s1 + $0x3c] sm:$0xf]
        %v326 = vld [vmem:[%s2] sm:$0x1]
        %v328 = vlaneseq
        %v329 = vshrl.u32 %v328, 7
        %v330 = vsub.s32 0, %v329
        %v331 = vrot.slane %v326, %v330
        %v365 = vunpack.c.l.b16 %v278
        %v366 = vunpack.c.l.b16 %v279
        %v367 = vunpack.c.l.b16 %v280
        %v368 = vunpack.c.l.b16 %v281
        %v369 = vunpack.c.l.b16 %v282
        %v370 = vunpack.c.l.b16 %v283
        %v371 = vunpack.c.l.b16 %v284
        %v372 = vunpack.c.l.b16 %v285
        %v373 = vunpack.c.l.b16 %v286
        %v374 = vunpack.c.l.b16 %v287
        %v375 = vunpack.c.l.b16 %v288
        %v376 = vunpack.c.l.b16 %v289
        %v377 = vunpack.c.l.b16 %v290
        %v378 = vunpack.c.l.b16 %v291
        %v379 = vunpack.c.l.b16 %v292
        %v380 = vunpack.c.l.b16 %v293
        %v381 = vunpack.c.l.b16 %v294
        %v382 = vunpack.c.l.b16 %v295
        %v383 = vunpack.c.l.b16 %v296
        %v384 = vunpack.c.l.b16 %v297
        %v385 = vunpack.c.l.b16 %v298
        %v386 = vunpack.c.l.b16 %v299
        %v387 = vunpack.c.l.b16 %v300
        %v388 = vunpack.c.l.b16 %v301
        %v389 = vunpack.c.l.b16 %v302
        %v390 = vunpack.c.l.b16 %v303
        %v391 = vunpack.c.l.b16 %v304
        %v392 = vunpack.c.l.b16 %v305
        %v393 = vunpack.c.l.b16 %v306
        %v394 = vunpack.c.l.b16 %v307
        %v395 = vunpack.c.l.b16 %v308
        %v396 = vunpack.c.l.b16 %v309
        %v397 = vpack.c.b16 %v366, %v365
        %v398 = vpack.c.b16 %v368, %v367
        %v399 = vpack.c.b16 %v370, %v369
        %v400 = vpack.c.b16 %v372, %v371
        %v401 = vpack.c.b16 %v374, %v373
        %v402 = vpack.c.b16 %v376, %v375
        %v403 = vpack.c.b16 %v378, %v377
        %v404 = vpack.c.b16 %v380, %v379
        %v405 = vpack.c.b16 %v382, %v381
        %v406 = vpack.c.b16 %v384, %v383
        %v407 = vpack.c.b16 %v386, %v385
        %v408 = vpack.c.b16 %v388, %v387
        %v409 = vpack.c.b16 %v390, %v389
        %v410 = vpack.c.b16 %v392, %v391
        %v411 = vpack.c.b16 %v394, %v393
        %v412 = vpack.c.b16 %v396, %v395
        %v445 = vunpack.c.l.b16 %v310
        %v446 = vunpack.c.l.b16 %v311
        %v447 = vunpack.c.l.b16 %v312
        %v448 = vunpack.c.l.b16 %v313
        %v449 = vunpack.c.l.b16 %v314
        %v450 = vunpack.c.l.b16 %v315
        %v451 = vunpack.c.l.b16 %v316
        %v452 = vunpack.c.l.b16 %v317
        %v453 = vunpack.c.l.b16 %v318
        %v454 = vunpack.c.l.b16 %v319
        %v455 = vunpack.c.l.b16 %v320
        %v456 = vunpack.c.l.b16 %v321
        %v457 = vunpack.c.l.b16 %v322
        %v458 = vunpack.c.l.b16 %v323
        %v459 = vunpack.c.l.b16 %v324
        %v460 = vunpack.c.l.b16 %v325
        %v461 = vpack.c.b16 %v446, %v445
        %v462 = vpack.c.b16 %v448, %v447
        %v463 = vpack.c.b16 %v450, %v449
        %v464 = vpack.c.b16 %v452, %v451
        %v465 = vpack.c.b16 %v454, %v453
        %v466 = vpack.c.b16 %v456, %v455
        %v467 = vpack.c.b16 %v458, %v457
        %v468 = vpack.c.b16 %v460, %v459
        %477 = vmatprep.subr.bf16.mxu0 0
        %478 = vmatpush1.bf16.msra.mxu0 %v461
        %479 = vmatprep.subr.bf16.mxu0 0
        %480 = vmatpush1.bf16.msra.mxu0 %v462
        %481 = vmatprep.subr.bf16.mxu0 0
        %482 = vmatpush1.bf16.msra.mxu0 %v463
        %483 = vmatprep.subr.bf16.mxu0 0
        %484 = vmatpush1.bf16.msra.mxu0 %v464
        %485 = vmatprep.subr.bf16.mxu0 0
        %486 = vmatpush1.bf16.msra.mxu0 %v465
        %487 = vmatprep.subr.bf16.mxu0 0
        %488 = vmatpush1.bf16.msra.mxu0 %v466
        %489 = vmatprep.subr.bf16.mxu0 0
        %490 = vmatpush1.bf16.msra.mxu0 %v467
        %491 = vmatprep.subr.bf16.mxu0 0
        %492 = vmatpush1.bf16.msra.mxu0 %v468
        %493 = vmatprep.subr.bf16.mxu0 0
        %494 = vmatpush1.bf16.msra.mxu0 0
        %495 = vmatprep.subr.bf16.mxu0 0
        %496 = vmatpush1.bf16.msra.mxu0 0
        %497 = vmatprep.subr.bf16.mxu0 0
        %498 = vmatpush1.bf16.msra.mxu0 0
        %499 = vmatprep.subr.bf16.mxu0 0
        %500 = vmatpush1.bf16.msra.mxu0 0
        %501 = vmatprep.subr.bf16.mxu0 0
        %502 = vmatpush1.bf16.msra.mxu0 0
        %503 = vmatprep.subr.bf16.mxu0 0
        %504 = vmatpush1.bf16.msra.mxu0 0
        %505 = vmatprep.subr.bf16.mxu0 0
        %506 = vmatpush1.bf16.msra.mxu0 0
        %507 = vmatprep.subr.bf16.mxu0 0
        %508 = vmatpush1.bf16.msra.mxu0 0
        %509 = vmatprep.mubr.bf16.mxu0 0
        %510 = vmatmul.mubr.bf16.gmra.mrb[0].mxu0 %v397
        %v511 = vpop.f32.mrb[0].mxu0
        %v512 = vadd.f32 %v331, %v511
        %v513 = vpop.f32.mrb[0].mxu0
        %v514 = vpop.f32.mrb[0].mxu0
        %v515 = vadd.f32 %v331, %v514
        %v516 = vpop.f32.mrb[0].mxu0
        %517 = vmatprep.mubr.bf16.mxu0 0
        %518 = vmatmul.mubr.bf16.gmra.mrb[0].mxu0 %v398
        %v519 = vpop.f32.mrb[0].mxu0
        %v520 = vadd.f32 %v331, %v519
        %v521 = vpop.f32.mrb[0].mxu0
        %v522 = vpop.f32.mrb[0].mxu0
        %v523 = vadd.f32 %v331, %v522
        %v524 = vpop.f32.mrb[0].mxu0
        %525 = vmatprep.mubr.bf16.mxu0 0
        %526 = vmatmul.mubr.bf16.gmra.mrb[0].mxu0 %v399
        %v527 = vpop.f32.mrb[0].mxu0
        %v528 = vadd.f32 %v331, %v527
        %v529 = vpop.f32.mrb[0].mxu0
        %v530 = vpop.f32.mrb[0].mxu0
        %v531 = vadd.f32 %v331, %v530
        %v532 = vpop.f32.mrb[0].mxu0
        %533 = vmatprep.mubr.bf16.mxu0 0
        %534 = vmatmul.mubr.bf16.gmra.mrb[0].mxu0 %v400
        %v535 = vpop.f32.mrb[0].mxu0
        %v536 = vadd.f32 %v331, %v535
        %v537 = vpop.f32.mrb[0].mxu0
        %v538 = vpop.f32.mrb[0].mxu0
        %v539 = vadd.f32 %v331, %v538
        %v540 = vpop.f32.mrb[0].mxu0
        %541 = vmatprep.mubr.bf16.mxu0 0
        %542 = vmatmul.mubr.bf16.gmra.mrb[0].mxu0 %v401
        %v543 = vpop.f32.mrb[0].mxu0
        %v544 = vadd.f32 %v331, %v543
        %v545 = vpop.f32.mrb[0].mxu0
        %v546 = vpop.f32.mrb[0].mxu0
        %v547 = vadd.f32 %v331, %v546
        %v548 = vpop.f32.mrb[0].mxu0
        %549 = vmatprep.mubr.bf16.mxu0 0
        %550 = vmatmul.mubr.bf16.gmra.mrb[0].mxu0 %v402
        %v551 = vpop.f32.mrb[0].mxu0
        %v552 = vadd.f32 %v331, %v551
        %v553 = vpop.f32.mrb[0].mxu0
        %v554 = vpop.f32.mrb[0].mxu0
        %v555 = vadd.f32 %v331, %v554
        %v556 = vpop.f32.mrb[0].mxu0
        %557 = vmatprep.mubr.bf16.mxu0 0
        %558 = vmatmul.mubr.bf16.gmra.mrb[0].mxu0 %v403
        %v559 = vpop.f32.mrb[0].mxu0
        %v560 = vadd.f32 %v331, %v559
        %v561 = vpop.f32.mrb[0].mxu0
        %v562 = vpop.f32.mrb[0].mxu0
        %v563 = vadd.f32 %v331, %v562
        %v564 = vpop.f32.mrb[0].mxu0
        %565 = vmatprep.mubr.bf16.mxu0 0
        %566 = vmatmul.mubr.bf16.gmra.mrb[0].mxu0 %v404
        %v567 = vpop.f32.mrb[0].mxu0
        %v568 = vadd.f32 %v331, %v567
        %v569 = vpop.f32.mrb[0].mxu0
        %v570 = vpop.f32.mrb[0].mxu0
        %v571 = vadd.f32 %v331, %v570
        %v572 = vpop.f32.mrb[0].mxu0
        %573 = vmatprep.mubr.bf16.mxu0 0
        %574 = vmatmul.mubr.bf16.gmra.mrb[0].mxu0 %v405
        %v575 = vpop.f32.mrb[0].mxu0
        %v576 = vadd.f32 %v331, %v575
        %v577 = vpop.f32.mrb[0].mxu0
        %v578 = vpop.f32.mrb[0].mxu0
        %v579 = vadd.f32 %v331, %v578
        %v580 = vpop.f32.mrb[0].mxu0
        %581 = vmatprep.mubr.bf16.mxu0 0
        %582 = vmatmul.mubr.bf16.gmra.mrb[0].mxu0 %v406
        %v583 = vpop.f32.mrb[0].mxu0
        %v584 = vadd.f32 %v331, %v583
        %v585 = vpop.f32.mrb[0].mxu0
        %v586 = vpop.f32.mrb[0].mxu0
        %v587 = vadd.f32 %v331, %v586
        %v588 = vpop.f32.mrb[0].mxu0
        %589 = vmatprep.mubr.bf16.mxu0 0
        %590 = vmatmul.mubr.bf16.gmra.mrb[0].mxu0 %v407
        %v591 = vpop.f32.mrb[0].mxu0
        %v592 = vadd.f32 %v331, %v591
        %v593 = vpop.f32.mrb[0].mxu0
        %v594 = vpop.f32.mrb[0].mxu0
        %v595 = vadd.f32 %v331, %v594
        %v596 = vpop.f32.mrb[0].mxu0
        %597 = vmatprep.mubr.bf16.mxu0 0
        %598 = vmatmul.mubr.bf16.gmra.mrb[0].mxu0 %v408
        %v599 = vpop.f32.mrb[0].mxu0
        %v600 = vadd.f32 %v331, %v599
        %v601 = vpop.f32.mrb[0].mxu0
        %v602 = vpop.f32.mrb[0].mxu0
        %v603 = vadd.f32 %v331, %v602
        %v604 = vpop.f32.mrb[0].mxu0
        %605 = vmatprep.mubr.bf16.mxu0 0
        %606 = vmatmul.mubr.bf16.gmra.mrb[0].mxu0 %v409
        %v607 = vpop.f32.mrb[0].mxu0
        %v608 = vadd.f32 %v331, %v607
        %v609 = vpop.f32.mrb[0].mxu0
        %v610 = vpop.f32.mrb[0].mxu0
        %v611 = vadd.f32 %v331, %v610
        %v612 = vpop.f32.mrb[0].mxu0
        %613 = vmatprep.mubr.bf16.mxu0 0
        %614 = vmatmul.mubr.bf16.gmra.mrb[0].mxu0 %v410
        %v615 = vpop.f32.mrb[0].mxu0
        %v616 = vadd.f32 %v331, %v615
        %v617 = vpop.f32.mrb[0].mxu0
        %v618 = vpop.f32.mrb[0].mxu0
        %v619 = vadd.f32 %v331, %v618
        %v620 = vpop.f32.mrb[0].mxu0
        %621 = vmatprep.mubr.bf16.mxu0 0
        %622 = vmatmul.mubr.bf16.gmra.mrb[0].mxu0 %v411
        %v623 = vpop.f32.mrb[0].mxu0
        %v624 = vadd.f32 %v331, %v623
        %v625 = vpop.f32.mrb[0].mxu0
        %v626 = vpop.f32.mrb[0].mxu0
        %v627 = vadd.f32 %v331, %v626
        %v628 = vpop.f32.mrb[0].mxu0
        %629 = vmatprep.mubr.bf16.mxu0 0
        %630 = vmatmul.mubr.bf16.gmra.mrb[0].mxu0 %v412
        %v631 = vpop.f32.mrb[0].mxu0
        %v632 = vadd.f32 %v331, %v631
        %v633 = vpop.f32.mrb[0].mxu0
        %v634 = vpop.f32.mrb[0].mxu0
        %v635 = vadd.f32 %v331, %v634
        %v636 = vpop.f32.mrb[0].mxu0
        %637 = vdwg.mxu0
        %v638 = vmax.f32 %v512, 0.0
        %v639 = vmax.f32 %v515, 0.0
        %v640 = vmax.f32 %v520, 0.0
        %v641 = vmax.f32 %v523, 0.0
        %v642 = vmax.f32 %v528, 0.0
        %v643 = vmax.f32 %v531, 0.0
        %v644 = vmax.f32 %v536, 0.0
        %v645 = vmax.f32 %v539, 0.0
        %v646 = vmax.f32 %v544, 0.0
        %v647 = vmax.f32 %v547, 0.0
        %v648 = vmax.f32 %v552, 0.0
        %v649 = vmax.f32 %v555, 0.0
        %v650 = vmax.f32 %v560, 0.0
        %v651 = vmax.f32 %v563, 0.0
        %v652 = vmax.f32 %v568, 0.0
        %v653 = vmax.f32 %v571, 0.0
        %v654 = vmax.f32 %v576, 0.0
        %v655 = vmax.f32 %v579, 0.0
        %v656 = vmax.f32 %v584, 0.0
        %v657 = vmax.f32 %v587, 0.0
        %v658 = vmax.f32 %v592, 0.0
        %v659 = vmax.f32 %v595, 0.0
        %v660 = vmax.f32 %v600, 0.0
        %v661 = vmax.f32 %v603, 0.0
        %v662 = vmax.f32 %v608, 0.0
        %v663 = vmax.f32 %v611, 0.0
        %v664 = vmax.f32 %v616, 0.0
        %v665 = vmax.f32 %v619, 0.0
        %v666 = vmax.f32 %v624, 0.0
        %v667 = vmax.f32 %v627, 0.0
        %v668 = vmax.f32 %v632, 0.0
        %v669 = vmax.f32 %v635, 0.0
        %v670 = vpack.c.bf16 %v639, %v638
        %v671 = vpack.c.bf16 %v641, %v640
        %v672 = vpack.c.bf16 %v643, %v642
        %v673 = vpack.c.bf16 %v645, %v644
        %v674 = vpack.c.bf16 %v647, %v646
        %v675 = vpack.c.bf16 %v649, %v648
        %v676 = vpack.c.bf16 %v651, %v650
        %v677 = vpack.c.bf16 %v653, %v652
        %v678 = vpack.c.bf16 %v655, %v654
        %v679 = vpack.c.bf16 %v657, %v656
        %v680 = vpack.c.bf16 %v659, %v658
        %v681 = vpack.c.bf16 %v661, %v660
        %v682 = vpack.c.bf16 %v663, %v662
        %v683 = vpack.c.bf16 %v665, %v664
        %v684 = vpack.c.bf16 %v667, %v666
        %v685 = vpack.c.bf16 %v669, %v668
        %vm686 = vcmask 785408
        %687 = vst.msk [vmem:[#allocation2] sm:$0xff] %vm686, 0
        %s688 = scalar_lea.vmem [#allocation2], 136
        %689 = vst.msk [vmem:[%s688] sm:$0xff] %vm686, 0
        %706 = vrot.lane.b32.xlu0 %v670, 32
        %v707 = vpop.permute.xlu0 %706
        %708 = vrot.lane.b32.xlu0 %v671, 32
        %v709 = vpop.permute.xlu0 %708
        %710 = vrot.lane.b32.xlu0 %v672, 32
        %v711 = vpop.permute.xlu0 %710
        %712 = vrot.lane.b32.xlu0 %v673, 32
        %v713 = vpop.permute.xlu0 %712
        %714 = vrot.lane.b32.xlu0 %v674, 32
        %v715 = vpop.permute.xlu0 %714
        %716 = vrot.lane.b32.xlu0 %v675, 32
        %v717 = vpop.permute.xlu0 %716
        %718 = vrot.lane.b32.xlu0 %v676, 32
        %v719 = vpop.permute.xlu0 %718
        %720 = vrot.lane.b32.xlu0 %v677, 32
        %v721 = vpop.permute.xlu0 %720
        %722 = vrot.lane.b32.xlu0 %v678, 32
        %v723 = vpop.permute.xlu0 %722
        %724 = vrot.lane.b32.xlu0 %v679, 32
        %v725 = vpop.permute.xlu0 %724
        %726 = vrot.lane.b32.xlu0 %v680, 32
        %v727 = vpop.permute.xlu0 %726
        %728 = vrot.lane.b32.xlu0 %v681, 32
        %v729 = vpop.permute.xlu0 %728
        %730 = vrot.lane.b32.xlu0 %v682, 32
        %v731 = vpop.permute.xlu0 %730
        %732 = vrot.lane.b32.xlu0 %v683, 32
        %v733 = vpop.permute.xlu0 %732
        %734 = vrot.lane.b32.xlu0 %v684, 32
        %v735 = vpop.permute.xlu0 %734
        %736 = vrot.lane.b32.xlu0 %v685, 32
        %v737 = vpop.permute.xlu0 %736
        %s754 = scalar_lea.vmem [#allocation2], 8
        %vm755 = vcmask 523520
        %756 = vst.msk [vmem:[%s754] sm:$0xff] %vm755, %v707
        %757 = vst.msk [vmem:[%s754 + $0x8] sm:$0xff] %vm755, %v709
        %758 = vst.msk [vmem:[%s754 + $0x10] sm:$0xff] %vm755, %v711
        %759 = vst.msk [vmem:[%s754 + $0x18] sm:$0xff] %vm755, %v713
        %760 = vst.msk [vmem:[%s754 + $0x20] sm:$0xff] %vm755, %v715
        %761 = vst.msk [vmem:[%s754 + $0x28] sm:$0xff] %vm755, %v717
        %762 = vst.msk [vmem:[%s754 + $0x30] sm:$0xff] %vm755, %v719
        %763 = vst.msk [vmem:[%s754 + $0x38] sm:$0xff] %vm755, %v721
        %764 = vst.msk [vmem:[%s754 + $0x40] sm:$0xff] %vm755, %v723
        %765 = vst.msk [vmem:[%s754 + $0x48] sm:$0xff] %vm755, %v725
        %766 = vst.msk [vmem:[%s754 + $0x50] sm:$0xff] %vm755, %v727
        %767 = vst.msk [vmem:[%s754 + $0x58] sm:$0xff] %vm755, %v729
        %768 = vst.msk [vmem:[%s754 + $0x60] sm:$0xff] %vm755, %v731
        %769 = vst.msk [vmem:[%s754 + $0x68] sm:$0xff] %vm755, %v733
        %770 = vst.msk [vmem:[%s754 + $0x70] sm:$0xff] %vm755, %v735
        %771 = vst.msk [vmem:[%s754 + $0x78] sm:$0xff] %vm755, %v737
        %v773 = vshrl.u32 %v670, 16
        %v775 = vrot.slane %v773, 7
        %v776 = vshll.u32 %v670, 16
        %v778 = vor.u32 %v775, %v776
        %v780 = vshrl.u32 %v671, 16
        %v782 = vrot.slane %v780, 7
        %v783 = vshll.u32 %v671, 16
        %v785 = vor.u32 %v782, %v783
        %v787 = vshrl.u32 %v672, 16
        %v789 = vrot.slane %v787, 7
        %v790 = vshll.u32 %v672, 16
        %v792 = vor.u32 %v789, %v790
        %v794 = vshrl.u32 %v673, 16
        %v796 = vrot.slane %v794, 7
        %v797 = vshll.u32 %v673, 16
        %v799 = vor.u32 %v796, %v797
        %v801 = vshrl.u32 %v674, 16
        %v803 = vrot.slane %v801, 7
        %v804 = vshll.u32 %v674, 16
        %v806 = vor.u32 %v803, %v804
        %v808 = vshrl.u32 %v675, 16
        %v810 = vrot.slane %v808, 7
        %v811 = vshll.u32 %v675, 16
        %v813 = vor.u32 %v810, %v811
        %v815 = vshrl.u32 %v676, 16
        %v817 = vrot.slane %v815, 7
        %v818 = vshll.u32 %v676, 16
        %v820 = vor.u32 %v817, %v818
        %v822 = vshrl.u32 %v677, 16
        %v824 = vrot.slane %v822, 7
        %v825 = vshll.u32 %v677, 16
        %v827 = vor.u32 %v824, %v825
        %v829 = vshrl.u32 %v678, 16
        %v831 = vrot.slane %v829, 7
        %v832 = vshll.u32 %v678, 16
        %v834 = vor.u32 %v831, %v832
        %v836 = vshrl.u32 %v679, 16
        %v838 = vrot.slane %v836, 7
        %v839 = vshll.u32 %v679, 16
        %v841 = vor.u32 %v838, %v839
        %v843 = vshrl.u32 %v680, 16
        %v845 = vrot.slane %v843, 7
        %v846 = vshll.u32 %v680, 16
        %v848 = vor.u32 %v845, %v846
        %v850 = vshrl.u32 %v681, 16
        %v852 = vrot.slane %v850, 7
        %v853 = vshll.u32 %v681, 16
        %v855 = vor.u32 %v852, %v853
        %v857 = vshrl.u32 %v682, 16
        %v859 = vrot.slane %v857, 7
        %v860 = vshll.u32 %v682, 16
        %v862 = vor.u32 %v859, %v860
        %v864 = vshrl.u32 %v683, 16
        %v866 = vrot.slane %v864, 7
        %v867 = vshll.u32 %v683, 16
        %v869 = vor.u32 %v866, %v867
        %v871 = vshrl.u32 %v684, 16
        %v873 = vrot.slane %v871, 7
        %v874 = vshll.u32 %v684, 16
        %v876 = vor.u32 %v873, %v874
        %v878 = vshrl.u32 %v685, 16
        %v880 = vrot.slane %v878, 7
        %v881 = vshll.u32 %v685, 16
        %v883 = vor.u32 %v880, %v881
        %vm900 = vcmask 261120
        %vm901 = vsmask.f32 7938
        %vm902 = vmand %vm900, %vm901
        %v903 = vld [vmem:[%s754] sm:$0xff]
        %v904 = vsel %vm902, %v778, %v903
        %905 = vst [vmem:[%s754] sm:$0xff] %v904
        %v906 = vld [vmem:[%s754 + $0x8] sm:$0xff]
        %v907 = vsel %vm902, %v785, %v906
        %908 = vst [vmem:[%s754 + $0x8] sm:$0xff] %v907
        %v909 = vld [vmem:[%s754 + $0x10] sm:$0xff]
        %v910 = vsel %vm902, %v792, %v909
        %911 = vst [vmem:[%s754 + $0x10] sm:$0xff] %v910
        %v912 = vld [vmem:[%s754 + $0x18] sm:$0xff]
        %v913 = vsel %vm902, %v799, %v912
        %914 = vst [vmem:[%s754 + $0x18] sm:$0xff] %v913
        %v915 = vld [vmem:[%s754 + $0x20] sm:$0xff]
        %v916 = vsel %vm902, %v806, %v915
        %917 = vst [vmem:[%s754 + $0x20] sm:$0xff] %v916
        %v918 = vld [vmem:[%s754 + $0x28] sm:$0xff]
        %v919 = vsel %vm902, %v813, %v918
        %920 = vst [vmem:[%s754 + $0x28] sm:$0xff] %v919
        %v921 = vld [vmem:[%s754 + $0x30] sm:$0xff]
        %v922 = vsel %vm902, %v820, %v921
        %923 = vst [vmem:[%s754 + $0x30] sm:$0xff] %v922
        %v924 = vld [vmem:[%s754 + $0x38] sm:$0xff]
        %v925 = vsel %vm902, %v827, %v924
        %926 = vst [vmem:[%s754 + $0x38] sm:$0xff] %v925
        %v927 = vld [vmem:[%s754 + $0x40] sm:$0xff]
        %v928 = vsel %vm902, %v834, %v927
        %929 = vst [vmem:[%s754 + $0x40] sm:$0xff] %v928
        %v930 = vld [vmem:[%s754 + $0x48] sm:$0xff]
        %v931 = vsel %vm902, %v841, %v930
        %932 = vst [vmem:[%s754 + $0x48] sm:$0xff] %v931
        %v933 = vld [vmem:[%s754 + $0x50] sm:$0xff]
        %v934 = vsel %vm902, %v848, %v933
        %935 = vst [vmem:[%s754 + $0x50] sm:$0xff] %v934
        %v936 = vld [vmem:[%s754 + $0x58] sm:$0xff]
        %v937 = vsel %vm902, %v855, %v936
        %938 = vst [vmem:[%s754 + $0x58] sm:$0xff] %v937
        %v939 = vld [vmem:[%s754 + $0x60] sm:$0xff]
        %v940 = vsel %vm902, %v862, %v939
        %941 = vst [vmem:[%s754 + $0x60] sm:$0xff] %v940
        %v942 = vld [vmem:[%s754 + $0x68] sm:$0xff]
        %v943 = vsel %vm902, %v869, %v942
        %944 = vst [vmem:[%s754 + $0x68] sm:$0xff] %v943
        %v945 = vld [vmem:[%s754 + $0x70] sm:$0xff]
        %v946 = vsel %vm902, %v876, %v945
        %947 = vst [vmem:[%s754 + $0x70] sm:$0xff] %v946
        %v948 = vld [vmem:[%s754 + $0x78] sm:$0xff]
        %v949 = vsel %vm902, %v883, %v948
        %950 = vst [vmem:[%s754 + $0x78] sm:$0xff] %v949
        %vm951 = vcmask 253952
        %vm952 = vsmask.f32 256
        %vm953 = vmand %vm951, %vm952
        %v954 = vld [vmem:[%s754] sm:$0x1]
        %v955 = vsel %vm953, 0, %v954
        %956 = vst [vmem:[%s754] sm:$0x1] %v955
        %v957 = vld [vmem:[%s754 + $0x8] sm:$0x1]
        %v958 = vsel %vm953, 0, %v957
        %959 = vst [vmem:[%s754 + $0x8] sm:$0x1] %v958
        %v960 = vld [vmem:[%s754 + $0x10] sm:$0x1]
        %v961 = vsel %vm953, 0, %v960
        %962 = vst [vmem:[%s754 + $0x10] sm:$0x1] %v961
        %v963 = vld [vmem:[%s754 + $0x18] sm:$0x1]
        %v964 = vsel %vm953, 0, %v963
        %965 = vst [vmem:[%s754 + $0x18] sm:$0x1] %v964
        %v966 = vld [vmem:[%s754 + $0x20] sm:$0x1]
        %v967 = vsel %vm953, 0, %v966
        %968 = vst [vmem:[%s754 + $0x20] sm:$0x1] %v967
        %v969 = vld [vmem:[%s754 + $0x28] sm:$0x1]
        %v970 = vsel %vm953, 0, %v969
        %971 = vst [vmem:[%s754 + $0x28] sm:$0x1] %v970
        %v972 = vld [vmem:[%s754 + $0x30] sm:$0x1]
        %v973 = vsel %vm953, 0, %v972
        %974 = vst [vmem:[%s754 + $0x30] sm:$0x1] %v973
        %v975 = vld [vmem:[%s754 + $0x38] sm:$0x1]
        %v976 = vsel %vm953, 0, %v975
        %977 = vst [vmem:[%s754 + $0x38] sm:$0x1] %v976
        %v978 = vld [vmem:[%s754 + $0x40] sm:$0x1]
        %v979 = vsel %vm953, 0, %v978
        %980 = vst [vmem:[%s754 + $0x40] sm:$0x1] %v979
        %v981 = vld [vmem:[%s754 + $0x48] sm:$0x1]
        %v982 = vsel %vm953, 0, %v981
        %983 = vst [vmem:[%s754 + $0x48] sm:$0x1] %v982
        %v984 = vld [vmem:[%s754 + $0x50] sm:$0x1]
        %v985 = vsel %vm953, 0, %v984
        %986 = vst [vmem:[%s754 + $0x50] sm:$0x1] %v985
        %v987 = vld [vmem:[%s754 + $0x58] sm:$0x1]
        %v988 = vsel %vm953, 0, %v987
        %989 = vst [vmem:[%s754 + $0x58] sm:$0x1] %v988
        %v990 = vld [vmem:[%s754 + $0x60] sm:$0x1]
        %v991 = vsel %vm953, 0, %v990
        %992 = vst [vmem:[%s754 + $0x60] sm:$0x1] %v991
        %v993 = vld [vmem:[%s754 + $0x68] sm:$0x1]
        %v994 = vsel %vm953, 0, %v993
        %995 = vst [vmem:[%s754 + $0x68] sm:$0x1] %v994
        %v996 = vld [vmem:[%s754 + $0x70] sm:$0x1]
        %v997 = vsel %vm953, 0, %v996
        %998 = vst [vmem:[%s754 + $0x70] sm:$0x1] %v997
        %v999 = vld [vmem:[%s754 + $0x78] sm:$0x1]
        %v1000 = vsel %vm953, 0, %v999
        %1001 = vst [vmem:[%s754 + $0x78] sm:$0x1] %v1000
        %v1002 = vrot.slane %v776, 1
        %v1003 = vor.u32 %v773, %v1002
        %v1004 = vrot.slane %v783, 1
        %v1005 = vor.u32 %v780, %v1004
        %v1006 = vrot.slane %v790, 1
        %v1007 = vor.u32 %v787, %v1006
        %v1008 = vrot.slane %v797, 1
        %v1009 = vor.u32 %v794, %v1008
        %v1010 = vrot.slane %v804, 1
        %v1011 = vor.u32 %v801, %v1010
        %v1012 = vrot.slane %v811, 1
        %v1013 = vor.u32 %v808, %v1012
        %v1014 = vrot.slane %v818, 1
        %v1015 = vor.u32 %v815, %v1014
        %v1016 = vrot.slane %v825, 1
        %v1017 = vor.u32 %v822, %v1016
        %v1018 = vrot.slane %v832, 1
        %v1019 = vor.u32 %v829, %v1018
        %v1020 = vrot.slane %v839, 1
        %v1021 = vor.u32 %v836, %v1020
        %v1022 = vrot.slane %v846, 1
        %v1023 = vor.u32 %v843, %v1022
        %v1024 = vrot.slane %v853, 1
        %v1025 = vor.u32 %v850, %v1024
        %v1026 = vrot.slane %v860, 1
        %v1027 = vor.u32 %v857, %v1026
        %v1028 = vrot.slane %v867, 1
        %v1029 = vor.u32 %v864, %v1028
        %v1030 = vrot.slane %v874, 1
        %v1031 = vor.u32 %v871, %v1030
        %v1032 = vrot.slane %v881, 1
        %v1033 = vor.u32 %v878, %v1032
        %1034 = vrot.lane.b32.xlu0 %v1003, 64
        %v1035 = vpop.permute.xlu0 %1034
        %1036 = vrot.lane.b32.xlu0 %v1005, 64
        %v1037 = vpop.permute.xlu0 %1036
        %1038 = vrot.lane.b32.xlu0 %v1007, 64
        %v1039 = vpop.permute.xlu0 %1038
        %1040 = vrot.lane.b32.xlu0 %v1009, 64
        %v1041 = vpop.permute.xlu0 %1040
        %1042 = vrot.lane.b32.xlu0 %v1011, 64
        %v1043 = vpop.permute.xlu0 %1042
        %1044 = vrot.lane.b32.xlu0 %v1013, 64
        %v1045 = vpop.permute.xlu0 %1044
        %1046 = vrot.lane.b32.xlu0 %v1015, 64
        %v1047 = vpop.permute.xlu0 %1046
        %1048 = vrot.lane.b32.xlu0 %v1017, 64
        %v1049 = vpop.permute.xlu0 %1048
        %1050 = vrot.lane.b32.xlu0 %v1019, 64
        %v1051 = vpop.permute.xlu0 %1050
        %1052 = vrot.lane.b32.xlu0 %v1021, 64
        %v1053 = vpop.permute.xlu0 %1052
        %1054 = vrot.lane.b32.xlu0 %v1023, 64
        %v1055 = vpop.permute.xlu0 %1054
        %1056 = vrot.lane.b32.xlu0 %v1025, 64
        %v1057 = vpop.permute.xlu0 %1056
        %1058 = vrot.lane.b32.xlu0 %v1027, 64
        %v1059 = vpop.permute.xlu0 %1058
        %1060 = vrot.lane.b32.xlu0 %v1029, 64
        %v1061 = vpop.permute.xlu0 %1060
        %1062 = vrot.lane.b32.xlu0 %v1031, 64
        %v1063 = vpop.permute.xlu0 %1062
        %1064 = vrot.lane.b32.xlu0 %v1033, 64
        %v1065 = vpop.permute.xlu0 %1064
        %vm1082 = vcmask 785920
        %vm1083 = vsmask.f32 7424
        %vm1084 = vmand %vm1082, %vm1083
        %v1085 = vld [vmem:[%s754] sm:$0xff]
        %v1086 = vsel %vm1084, %v1035, %v1085
        %1087 = vst [vmem:[%s754] sm:$0xff] %v1086
        %v1088 = vld [vmem:[%s754 + $0x8] sm:$0xff]
        %v1089 = vsel %vm1084, %v1037, %v1088
        %1090 = vst [vmem:[%s754 + $0x8] sm:$0xff] %v1089
        %v1091 = vld [vmem:[%s754 + $0x10] sm:$0xff]
        %v1092 = vsel %vm1084, %v1039, %v1091
        %1093 = vst [vmem:[%s754 + $0x10] sm:$0xff] %v1092
        %v1094 = vld [vmem:[%s754 + $0x18] sm:$0xff]
        %v1095 = vsel %vm1084, %v1041, %v1094
        %1096 = vst [vmem:[%s754 + $0x18] sm:$0xff] %v1095
        %v1097 = vld [vmem:[%s754 + $0x20] sm:$0xff]
        %v1098 = vsel %vm1084, %v1043, %v1097
        %1099 = vst [vmem:[%s754 + $0x20] sm:$0xff] %v1098
        %v1100 = vld [vmem:[%s754 + $0x28] sm:$0xff]
        %v1101 = vsel %vm1084, %v1045, %v1100
        %1102 = vst [vmem:[%s754 + $0x28] sm:$0xff] %v1101
        %v1103 = vld [vmem:[%s754 + $0x30] sm:$0xff]
        %v1104 = vsel %vm1084, %v1047, %v1103
        %1105 = vst [vmem:[%s754 + $0x30] sm:$0xff] %v1104
        %v1106 = vld [vmem:[%s754 + $0x38] sm:$0xff]
        %v1107 = vsel %vm1084, %v1049, %v1106
        %1108 = vst [vmem:[%s754 + $0x38] sm:$0xff] %v1107
        %v1109 = vld [vmem:[%s754 + $0x40] sm:$0xff]
        %v1110 = vsel %vm1084, %v1051, %v1109
        %1111 = vst [vmem:[%s754 + $0x40] sm:$0xff] %v1110
        %v1112 = vld [vmem:[%s754 + $0x48] sm:$0xff]
        %v1113 = vsel %vm1084, %v1053, %v1112
        %1114 = vst [vmem:[%s754 + $0x48] sm:$0xff] %v1113
        %v1115 = vld [vmem:[%s754 + $0x50] sm:$0xff]
        %v1116 = vsel %vm1084, %v1055, %v1115
        %1117 = vst [vmem:[%s754 + $0x50] sm:$0xff] %v1116
        %v1118 = vld [vmem:[%s754 + $0x58] sm:$0xff]
        %v1119 = vsel %vm1084, %v1057, %v1118
        %1120 = vst [vmem:[%s754 + $0x58] sm:$0xff] %v1119
        %v1121 = vld [vmem:[%s754 + $0x60] sm:$0xff]
        %v1122 = vsel %vm1084, %v1059, %v1121
        %1123 = vst [vmem:[%s754 + $0x60] sm:$0xff] %v1122
        %v1124 = vld [vmem:[%s754 + $0x68] sm:$0xff]
        %v1125 = vsel %vm1084, %v1061, %v1124
        %1126 = vst [vmem:[%s754 + $0x68] sm:$0xff] %v1125
        %v1127 = vld [vmem:[%s754 + $0x70] sm:$0xff]
        %v1128 = vsel %vm1084, %v1063, %v1127
        %1129 = vst [vmem:[%s754 + $0x70] sm:$0xff] %v1128
        %v1130 = vld [vmem:[%s754 + $0x78] sm:$0xff]
        %v1131 = vsel %vm1084, %v1065, %v1130
        %1132 = vst [vmem:[%s754 + $0x78] sm:$0xff] %v1131
        %vm1133 = vcmask 785927
        %vm1134 = vsmask.f32 7966
        %vm1135 = vmand %vm1133, %vm1134
        %v1136 = vld [vmem:[%s754] sm:$0x80]
        %v1137 = vsel %vm1135, 0, %v1136
        %1138 = vst [vmem:[%s754] sm:$0x80] %v1137
        %v1139 = vld [vmem:[%s754 + $0x8] sm:$0x80]
        %v1140 = vsel %vm1135, 0, %v1139
        %1141 = vst [vmem:[%s754 + $0x8] sm:$0x80] %v1140
        %v1142 = vld [vmem:[%s754 + $0x10] sm:$0x80]
        %v1143 = vsel %vm1135, 0, %v1142
        %1144 = vst [vmem:[%s754 + $0x10] sm:$0x80] %v1143
        %v1145 = vld [vmem:[%s754 + $0x18] sm:$0x80]
        %v1146 = vsel %vm1135, 0, %v1145
        %1147 = vst [vmem:[%s754 + $0x18] sm:$0x80] %v1146
        %v1148 = vld [vmem:[%s754 + $0x20] sm:$0x80]
        %v1149 = vsel %vm1135, 0, %v1148
        %1150 = vst [vmem:[%s754 + $0x20] sm:$0x80] %v1149
        %v1151 = vld [vmem:[%s754 + $0x28] sm:$0x80]
        %v1152 = vsel %vm1135, 0, %v1151
        %1153 = vst [vmem:[%s754 + $0x28] sm:$0x80] %v1152
        %v1154 = vld [vmem:[%s754 + $0x30] sm:$0x80]
        %v1155 = vsel %vm1135, 0, %v1154
        %1156 = vst [vmem:[%s754 + $0x30] sm:$0x80] %v1155
        %v1157 = vld [vmem:[%s754 + $0x38] sm:$0x80]
        %v1158 = vsel %vm1135, 0, %v1157
        %1159 = vst [vmem:[%s754 + $0x38] sm:$0x80] %v1158
        %v1160 = vld [vmem:[%s754 + $0x40] sm:$0x80]
        %v1161 = vsel %vm1135, 0, %v1160
        %1162 = vst [vmem:[%s754 + $0x40] sm:$0x80] %v1161
        %v1163 = vld [vmem:[%s754 + $0x48] sm:$0x80]
        %v1164 = vsel %vm1135, 0, %v1163
        %1165 = vst [vmem:[%s754 + $0x48] sm:$0x80] %v1164
        %v1166 = vld [vmem:[%s754 + $0x50] sm:$0x80]
        %v1167 = vsel %vm1135, 0, %v1166
        %1168 = vst [vmem:[%s754 + $0x50] sm:$0x80] %v1167
        %v1169 = vld [vmem:[%s754 + $0x58] sm:$0x80]
        %v1170 = vsel %vm1135, 0, %v1169
        %1171 = vst [vmem:[%s754 + $0x58] sm:$0x80] %v1170
        %v1172 = vld [vmem:[%s754 + $0x60] sm:$0x80]
        %v1173 = vsel %vm1135, 0, %v1172
        %1174 = vst [vmem:[%s754 + $0x60] sm:$0x80] %v1173
        %v1175 = vld [vmem:[%s754 + $0x68] sm:$0x80]
        %v1176 = vsel %vm1135, 0, %v1175
        %1177 = vst [vmem:[%s754 + $0x68] sm:$0x80] %v1176
        %v1178 = vld [vmem:[%s754 + $0x70] sm:$0x80]
        %v1179 = vsel %vm1135, 0, %v1178
        %1180 = vst [vmem:[%s754 + $0x70] sm:$0x80] %v1179
        %v1181 = vld [vmem:[%s754 + $0x78] sm:$0x80]
        %v1182 = vsel %vm1135, 0, %v1181
        %1183 = vst [vmem:[%s754 + $0x78] sm:$0x80] %v1182
        %v1184 = vld [vmem:[#allocation2] sm:$0xff]
        %v1185 = vld [vmem:[#allocation2 + $0x8] sm:$0xff]
        %v1186 = vld [vmem:[#allocation2 + $0x10] sm:$0xff]
        %v1187 = vld [vmem:[#allocation2 + $0x18] sm:$0xff]
        %v1188 = vld [vmem:[#allocation2 + $0x20] sm:$0xff]
        %v1189 = vld [vmem:[#allocation2 + $0x28] sm:$0xff]
        %v1190 = vld [vmem:[#allocation2 + $0x30] sm:$0xff]
        %v1191 = vld [vmem:[#allocation2 + $0x38] sm:$0xff]
        %v1192 = vld [vmem:[#allocation2 + $0x40] sm:$0xff]
        %v1193 = vld [vmem:[#allocation2 + $0x48] sm:$0xff]
        %v1194 = vld [vmem:[#allocation2 + $0x50] sm:$0xff]
        %v1195 = vld [vmem:[#allocation2 + $0x58] sm:$0xff]
        %v1196 = vld [vmem:[#allocation2 + $0x60] sm:$0xff]
        %v1197 = vld [vmem:[#allocation2 + $0x68] sm:$0xff]
        %v1198 = vld [vmem:[#allocation2 + $0x70] sm:$0xff]
        %v1199 = vld [vmem:[#allocation2 + $0x78] sm:$0xff]
        %v1200 = vld [vmem:[%s3] sm:$0xf]
        %v1201 = vld [vmem:[%s3 + $0x4] sm:$0xf]
        %v1202 = vld [vmem:[%s3 + $0x8] sm:$0xf]
        %v1203 = vld [vmem:[%s3 + $0xc] sm:$0xf]
        %v1204 = vld [vmem:[%s3 + $0x10] sm:$0xf]
        %v1205 = vld [vmem:[%s3 + $0x14] sm:$0xf]
        %v1206 = vld [vmem:[%s3 + $0x18] sm:$0xf]
        %v1207 = vld [vmem:[%s3 + $0x1c] sm:$0xf]
        %v1208 = vld [vmem:[%s3 + $0x20] sm:$0xf]
        %v1209 = vld [vmem:[%s3 + $0x24] sm:$0xf]
        %v1210 = vld [vmem:[%s3 + $0x28] sm:$0xf]
        %v1211 = vld [vmem:[%s3 + $0x2c] sm:$0xf]
        %v1212 = vld [vmem:[%s754] sm:$0xff]
        %v1213 = vld [vmem:[%s754 + $0x8] sm:$0xff]
        %v1214 = vld [vmem:[%s754 + $0x10] sm:$0xff]
        %v1215 = vld [vmem:[%s754 + $0x18] sm:$0xff]
        %v1216 = vld [vmem:[%s754 + $0x20] sm:$0xff]
        %v1217 = vld [vmem:[%s754 + $0x28] sm:$0xff]
        %v1218 = vld [vmem:[%s754 + $0x30] sm:$0xff]
        %v1219 = vld [vmem:[%s754 + $0x38] sm:$0xff]
        %v1220 = vld [vmem:[%s754 + $0x40] sm:$0xff]
        %v1221 = vld [vmem:[%s754 + $0x48] sm:$0xff]
        %v1222 = vld [vmem:[%s754 + $0x50] sm:$0xff]
        %v1223 = vld [vmem:[%s754 + $0x58] sm:$0xff]
        %v1224 = vld [vmem:[%s754 + $0x60] sm:$0xff]
        %v1225 = vld [vmem:[%s754 + $0x68] sm:$0xff]
        %v1226 = vld [vmem:[%s754 + $0x70] sm:$0xff]
        %v1227 = vld [vmem:[%s754 + $0x78] sm:$0xff]
        %s1228 = scalar_lea.vmem %s3, 48
        %v1229 = vld [vmem:[%s1228] sm:$0xf]
        %v1230 = vld [vmem:[%s1228 + $0x4] sm:$0xf]
        %v1231 = vld [vmem:[%s1228 + $0x8] sm:$0xf]
        %v1232 = vld [vmem:[%s1228 + $0xc] sm:$0xf]
        %v1233 = vld [vmem:[%s1228 + $0x10] sm:$0xf]
        %v1234 = vld [vmem:[%s1228 + $0x14] sm:$0xf]
        %v1235 = vld [vmem:[%s1228 + $0x18] sm:$0xf]
        %v1236 = vld [vmem:[%s1228 + $0x1c] sm:$0xf]
        %v1237 = vld [vmem:[%s1228 + $0x20] sm:$0xf]
        %v1238 = vld [vmem:[%s1228 + $0x24] sm:$0xf]
        %v1239 = vld [vmem:[%s1228 + $0x28] sm:$0xf]
        %v1240 = vld [vmem:[%s1228 + $0x2c] sm:$0xf]
        %v1253 = vunpack.c.l.b16 %v1229
        %v1254 = vunpack.c.l.b16 %v1230
        %v1255 = vunpack.c.l.b16 %v1231
        %v1256 = vunpack.c.l.b16 %v1232
        %v1257 = vunpack.c.l.b16 %v1233
        %v1258 = vunpack.c.l.b16 %v1234
        %v1259 = vunpack.c.l.b16 %v1235
        %v1260 = vunpack.c.l.b16 %v1236
        %v1261 = vunpack.c.l.b16 %v1237
        %v1262 = vunpack.c.l.b16 %v1238
        %v1263 = vunpack.c.l.b16 %v1239
        %v1264 = vunpack.c.l.b16 %v1240
        %v1265 = vpack.c.b16 %v1254, %v1253
        %v1266 = vpack.c.b16 %v1256, %v1255
        %v1267 = vpack.c.b16 %v1258, %v1257
        %v1268 = vpack.c.b16 %v1260, %v1259
        %v1269 = vpack.c.b16 %v1262, %v1261
        %v1270 = vpack.c.b16 %v1264, %v1263
        %v1278 = vsel %vm686, %v1212, 0
        %v1281 = vsel %vm686, %v1213, 0
        %v1284 = vsel %vm686, %v1214, 0
        %v1287 = vsel %vm686, %v1215, 0
        %v1290 = vsel %vm686, %v1216, 0
        %v1293 = vsel %vm686, %v1217, 0
        %v1296 = vsel %vm686, %v1218, 0
        %v1299 = vsel %vm686, %v1219, 0
        %v1302 = vsel %vm686, %v1220, 0
        %v1305 = vsel %vm686, %v1221, 0
        %v1308 = vsel %vm686, %v1222, 0
        %v1311 = vsel %vm686, %v1223, 0
        %v1314 = vsel %vm686, %v1224, 0
        %v1317 = vsel %vm686, %v1225, 0
        %v1320 = vsel %vm686, %v1226, 0
        %v1323 = vsel %vm686, %v1227, 0
        %1325 = vmatprep.subr.bf16.mxu0 0
        %1326 = vmatpush1.bf16.msra.mxu0 %v1265
        %1327 = vmatprep.subr.bf16.mxu0 0
        %1328 = vmatpush1.bf16.msra.mxu0 %v1266
        %1329 = vmatprep.subr.bf16.mxu0 0
        %1330 = vmatpush1.bf16.msra.mxu0 %v1267
        %1331 = vmatprep.subr.bf16.mxu0 0
        %1332 = vmatpush1.bf16.msra.mxu0 %v1268
        %1333 = vmatprep.subr.bf16.mxu0 0
        %1334 = vmatpush1.bf16.msra.mxu0 %v1269
        %1335 = vmatprep.subr.bf16.mxu0 0
        %1336 = vmatpush1.bf16.msra.mxu0 %v1270
        %1337 = vmatprep.subr.bf16.mxu0 0
        %1338 = vmatpush1.bf16.msra.mxu0 0
        %1339 = vmatprep.subr.bf16.mxu0 0
        %1340 = vmatpush1.bf16.msra.mxu0 0
        %1341 = vmatprep.subr.bf16.mxu0 0
        %1342 = vmatpush1.bf16.msra.mxu0 0
        %1343 = vmatprep.subr.bf16.mxu0 0
        %1344 = vmatpush1.bf16.msra.mxu0 0
        %1345 = vmatprep.subr.bf16.mxu0 0
        %1346 = vmatpush1.bf16.msra.mxu0 0
        %1347 = vmatprep.subr.bf16.mxu0 0
        %1348 = vmatpush1.bf16.msra.mxu0 0
        %1349 = vmatprep.subr.bf16.mxu0 0
        %1350 = vmatpush1.bf16.msra.mxu0 0
        %1351 = vmatprep.subr.bf16.mxu0 0
        %1352 = vmatpush1.bf16.msra.mxu0 0
        %1353 = vmatprep.subr.bf16.mxu0 0
        %1354 = vmatpush1.bf16.msra.mxu0 0
        %1355 = vmatprep.subr.bf16.mxu0 0
        %1356 = vmatpush1.bf16.msra.mxu0 0
        %1357 = vmatprep.mubr.bf16.mxu0 0
        %1358 = vmatmul.mubr.bf16.gmra.mrb[0].mxu0 %v1278
        %v1359 = vpop.f32.mrb[0].mxu0
        %v1360 = vadd.f32 0.0, %v1359
        %v1361 = vpop.f32.mrb[0].mxu0
        %v1362 = vpop.f32.mrb[0].mxu0
        %v1363 = vadd.f32 0.0, %v1362
        %v1364 = vpop.f32.mrb[0].mxu0
        %1365 = vmatprep.mubr.bf16.mxu0 0
        %1366 = vmatmul.mubr.bf16.gmra.mrb[0].mxu0 %v1281
        %v1367 = vpop.f32.mrb[0].mxu0
        %v1368 = vadd.f32 0.0, %v1367
        %v1369 = vpop.f32.mrb[0].mxu0
        %v1370 = vpop.f32.mrb[0].mxu0
        %v1371 = vadd.f32 0.0, %v1370
        %v1372 = vpop.f32.mrb[0].mxu0
        %1373 = vmatprep.mubr.bf16.mxu0 0
        %1374 = vmatmul.mubr.bf16.gmra.mrb[0].mxu0 %v1284
        %v1375 = vpop.f32.mrb[0].mxu0
        %v1376 = vadd.f32 0.0, %v1375
        %v1377 = vpop.f32.mrb[0].mxu0
        %v1378 = vpop.f32.mrb[0].mxu0
        %v1379 = vadd.f32 0.0, %v1378
        %v1380 = vpop.f32.mrb[0].mxu0
        %1381 = vmatprep.mubr.bf16.mxu0 0
        %1382 = vmatmul.mubr.bf16.gmra.mrb[0].mxu0 %v1287
        %v1383 = vpop.f32.mrb[0].mxu0
        %v1384 = vadd.f32 0.0, %v1383
        %v1385 = vpop.f32.mrb[0].mxu0
        %v1386 = vpop.f32.mrb[0].mxu0
        %v1387 = vadd.f32 0.0, %v1386
        %v1388 = vpop.f32.mrb[0].mxu0
        %1389 = vmatprep.mubr.bf16.mxu0 0
        %1390 = vmatmul.mubr.bf16.gmra.mrb[0].mxu0 %v1290
        %v1391 = vpop.f32.mrb[0].mxu0
        %v1392 = vadd.f32 0.0, %v1391
        %v1393 = vpop.f32.mrb[0].mxu0
        %v1394 = vpop.f32.mrb[0].mxu0
        %v1395 = vadd.f32 0.0, %v1394
        %v1396 = vpop.f32.mrb[0].mxu0
        %1397 = vmatprep.mubr.bf16.mxu0 0
        %1398 = vmatmul.mubr.bf16.gmra.mrb[0].mxu0 %v1293
        %v1399 = vpop.f32.mrb[0].mxu0
        %v1400 = vadd.f32 0.0, %v1399
        %v1401 = vpop.f32.mrb[0].mxu0
        %v1402 = vpop.f32.mrb[0].mxu0
        %v1403 = vadd.f32 0.0, %v1402
        %v1404 = vpop.f32.mrb[0].mxu0
        %1405 = vmatprep.mubr.bf16.mxu0 0
        %1406 = vmatmul.mubr.bf16.gmra.mrb[0].mxu0 %v1296
        %v1407 = vpop.f32.mrb[0].mxu0
        %v1408 = vadd.f32 0.0, %v1407
        %v1409 = vpop.f32.mrb[0].mxu0
        %v1410 = vpop.f32.mrb[0].mxu0
        %v1411 = vadd.f32 0.0, %v1410
        %v1412 = vpop.f32.mrb[0].mxu0
        %1413 = vmatprep.mubr.bf16.mxu0 0
        %1414 = vmatmul.mubr.bf16.gmra.mrb[0].mxu0 %v1299
        %v1415 = vpop.f32.mrb[0].mxu0
        %v1416 = vadd.f32 0.0, %v1415
        %v1417 = vpop.f32.mrb[0].mxu0
        %v1418 = vpop.f32.mrb[0].mxu0
        %v1419 = vadd.f32 0.0, %v1418
        %v1420 = vpop.f32.mrb[0].mxu0
        %1421 = vmatprep.mubr.bf16.mxu0 0
        %1422 = vmatmul.mubr.bf16.gmra.mrb[0].mxu0 %v1302
        %v1423 = vpop.f32.mrb[0].mxu0
        %v1424 = vadd.f32 0.0, %v1423
        %v1425 = vpop.f32.mrb[0].mxu0
        %v1426 = vpop.f32.mrb[0].mxu0
        %v1427 = vadd.f32 0.0, %v1426
        %v1428 = vpop.f32.mrb[0].mxu0
        %1429 = vmatprep.mubr.bf16.mxu0 0
        %1430 = vmatmul.mubr.bf16.gmra.mrb[0].mxu0 %v1305
        %v1431 = vpop.f32.mrb[0].mxu0
        %v1432 = vadd.f32 0.0, %v1431
        %v1433 = vpop.f32.mrb[0].mxu0
        %v1434 = vpop.f32.mrb[0].mxu0
        %v1435 = vadd.f32 0.0, %v1434
        %v1436 = vpop.f32.mrb[0].mxu0
        %1437 = vmatprep.mubr.bf16.mxu0 0
        %1438 = vmatmul.mubr.bf16.gmra.mrb[0].mxu0 %v1308
        %v1439 = vpop.f32.mrb[0].mxu0
        %v1440 = vadd.f32 0.0, %v1439
        %v1441 = vpop.f32.mrb[0].mxu0
        %v1442 = vpop.f32.mrb[0].mxu0
        %v1443 = vadd.f32 0.0, %v1442
        %v1444 = vpop.f32.mrb[0].mxu0
        %1445 = vmatprep.mubr.bf16.mxu0 0
        %1446 = vmatmul.mubr.bf16.gmra.mrb[0].mxu0 %v1311
        %v1447 = vpop.f32.mrb[0].mxu0
        %v1448 = vadd.f32 0.0, %v1447
        %v1449 = vpop.f32.mrb[0].mxu0
        %v1450 = vpop.f32.mrb[0].mxu0
        %v1451 = vadd.f32 0.0, %v1450
        %v1452 = vpop.f32.mrb[0].mxu0
        %1453 = vmatprep.mubr.bf16.mxu0 0
        %1454 = vmatmul.mubr.bf16.gmra.mrb[0].mxu0 %v1314
        %v1455 = vpop.f32.mrb[0].mxu0
        %v1456 = vadd.f32 0.0, %v1455
        %v1457 = vpop.f32.mrb[0].mxu0
        %v1458 = vpop.f32.mrb[0].mxu0
        %v1459 = vadd.f32 0.0, %v1458
        %v1460 = vpop.f32.mrb[0].mxu0
        %1461 = vmatprep.mubr.bf16.mxu0 0
        %1462 = vmatmul.mubr.bf16.gmra.mrb[0].mxu0 %v1317
        %v1463 = vpop.f32.mrb[0].mxu0
        %v1464 = vadd.f32 0.0, %v1463
        %v1465 = vpop.f32.mrb[0].mxu0
        %v1466 = vpop.f32.mrb[0].mxu0
        %v1467 = vadd.f32 0.0, %v1466
        %v1468 = vpop.f32.mrb[0].mxu0
        %1469 = vmatprep.mubr.bf16.mxu0 0
        %1470 = vmatmul.mubr.bf16.gmra.mrb[0].mxu0 %v1320
        %v1471 = vpop.f32.mrb[0].mxu0
        %v1472 = vadd.f32 0.0, %v1471
        %v1473 = vpop.f32.mrb[0].mxu0
        %v1474 = vpop.f32.mrb[0].mxu0
        %v1475 = vadd.f32 0.0, %v1474
        %v1476 = vpop.f32.mrb[0].mxu0
        %1477 = vmatprep.mubr.bf16.mxu0 0
        %1478 = vmatmul.mubr.bf16.gmra.mrb[0].mxu0 %v1323
        %v1479 = vpop.f32.mrb[0].mxu0
        %v1480 = vadd.f32 0.0, %v1479
        %v1481 = vpop.f32.mrb[0].mxu0
        %v1482 = vpop.f32.mrb[0].mxu0
        %v1483 = vadd.f32 0.0, %v1482
        %v1484 = vpop.f32.mrb[0].mxu0
        %1485 = vdwg.mxu0
        %v1498 = vunpack.c.l.b16 %v1200
        %v1499 = vunpack.c.l.b16 %v1201
        %v1500 = vunpack.c.l.b16 %v1202
        %v1501 = vunpack.c.l.b16 %v1203
        %v1502 = vunpack.c.l.b16 %v1204
        %v1503 = vunpack.c.l.b16 %v1205
        %v1504 = vunpack.c.l.b16 %v1206
        %v1505 = vunpack.c.l.b16 %v1207
        %v1506 = vunpack.c.l.b16 %v1208
        %v1507 = vunpack.c.l.b16 %v1209
        %v1508 = vunpack.c.l.b16 %v1210
        %v1509 = vunpack.c.l.b16 %v1211
        %v1510 = vpack.c.b16 %v1499, %v1498
        %v1511 = vpack.c.b16 %v1501, %v1500
        %v1512 = vpack.c.b16 %v1503, %v1502
        %v1513 = vpack.c.b16 %v1505, %v1504
        %v1514 = vpack.c.b16 %v1507, %v1506
        %v1515 = vpack.c.b16 %v1509, %v1508
        %v1523 = vsel %vm686, %v1184, 0
        %v1526 = vsel %vm686, %v1185, 0
        %v1529 = vsel %vm686, %v1186, 0
        %v1532 = vsel %vm686, %v1187, 0
        %v1535 = vsel %vm686, %v1188, 0
        %v1538 = vsel %vm686, %v1189, 0
        %v1541 = vsel %vm686, %v1190, 0
        %v1544 = vsel %vm686, %v1191, 0
        %v1547 = vsel %vm686, %v1192, 0
        %v1550 = vsel %vm686, %v1193, 0
        %v1553 = vsel %vm686, %v1194, 0
        %v1556 = vsel %vm686, %v1195, 0
        %v1559 = vsel %vm686, %v1196, 0
        %v1562 = vsel %vm686, %v1197, 0
        %v1565 = vsel %vm686, %v1198, 0
        %v1568 = vsel %vm686, %v1199, 0
        %1570 = vmatprep.subr.bf16.mxu0 0
        %1571 = vmatpush1.bf16.msra.mxu0 %v1510
        %1572 = vmatprep.subr.bf16.mxu0 0
        %1573 = vmatpush1.bf16.msra.mxu0 %v1511
        %1574 = vmatprep.subr.bf16.mxu0 0
        %1575 = vmatpush1.bf16.msra.mxu0 %v1512
        %1576 = vmatprep.subr.bf16.mxu0 0
        %1577 = vmatpush1.bf16.msra.mxu0 %v1513
        %1578 = vmatprep.subr.bf16.mxu0 0
        %1579 = vmatpush1.bf16.msra.mxu0 %v1514
        %1580 = vmatprep.subr.bf16.mxu0 0
        %1581 = vmatpush1.bf16.msra.mxu0 %v1515
        %1582 = vmatprep.subr.bf16.mxu0 0
        %1583 = vmatpush1.bf16.msra.mxu0 0
        %1584 = vmatprep.subr.bf16.mxu0 0
        %1585 = vmatpush1.bf16.msra.mxu0 0
        %1586 = vmatprep.subr.bf16.mxu0 0
        %1587 = vmatpush1.bf16.msra.mxu0 0
        %1588 = vmatprep.subr.bf16.mxu0 0
        %1589 = vmatpush1.bf16.msra.mxu0 0
        %1590 = vmatprep.subr.bf16.mxu0 0
        %1591 = vmatpush1.bf16.msra.mxu0 0
        %1592 = vmatprep.subr.bf16.mxu0 0
        %1593 = vmatpush1.bf16.msra.mxu0 0
        %1594 = vmatprep.subr.bf16.mxu0 0
        %1595 = vmatpush1.bf16.msra.mxu0 0
        %1596 = vmatprep.subr.bf16.mxu0 0
        %1597 = vmatpush1.bf16.msra.mxu0 0
        %1598 = vmatprep.subr.bf16.mxu0 0
        %1599 = vmatpush1.bf16.msra.mxu0 0
        %1600 = vmatprep.subr.bf16.mxu0 0
        %1601 = vmatpush1.bf16.msra.mxu0 0
        %1602 = vmatprep.mubr.bf16.mxu0 0
        %1603 = vmatmul.mubr.bf16.gmra.mrb[0].mxu0 %v1523
        %v1604 = vpop.f32.mrb[0].mxu0
        %v1605 = vadd.f32 %v1360, %v1604
        %v1606 = vpop.f32.mrb[0].mxu0
        %v1607 = vpop.f32.mrb[0].mxu0
        %v1608 = vadd.f32 %v1363, %v1607
        %v1609 = vpop.f32.mrb[0].mxu0
        %1610 = vmatprep.mubr.bf16.mxu0 0
        %1611 = vmatmul.mubr.bf16.gmra.mrb[0].mxu0 %v1526
        %v1612 = vpop.f32.mrb[0].mxu0
        %v1613 = vadd.f32 %v1368, %v1612
        %v1614 = vpop.f32.mrb[0].mxu0
        %v1615 = vpop.f32.mrb[0].mxu0
        %v1616 = vadd.f32 %v1371, %v1615
        %v1617 = vpop.f32.mrb[0].mxu0
        %1618 = vmatprep.mubr.bf16.mxu0 0
        %1619 = vmatmul.mubr.bf16.gmra.mrb[0].mxu0 %v1529
        %v1620 = vpop.f32.mrb[0].mxu0
        %v1621 = vadd.f32 %v1376, %v1620
        %v1622 = vpop.f32.mrb[0].mxu0
        %v1623 = vpop.f32.mrb[0].mxu0
        %v1624 = vadd.f32 %v1379, %v1623
        %v1625 = vpop.f32.mrb[0].mxu0
        %1626 = vmatprep.mubr.bf16.mxu0 0
        %1627 = vmatmul.mubr.bf16.gmra.mrb[0].mxu0 %v1532
        %v1628 = vpop.f32.mrb[0].mxu0
        %v1629 = vadd.f32 %v1384, %v1628
        %v1630 = vpop.f32.mrb[0].mxu0
        %v1631 = vpop.f32.mrb[0].mxu0
        %v1632 = vadd.f32 %v1387, %v1631
        %v1633 = vpop.f32.mrb[0].mxu0
        %1634 = vmatprep.mubr.bf16.mxu0 0
        %1635 = vmatmul.mubr.bf16.gmra.mrb[0].mxu0 %v1535
        %v1636 = vpop.f32.mrb[0].mxu0
        %v1637 = vadd.f32 %v1392, %v1636
        %v1638 = vpop.f32.mrb[0].mxu0
        %v1639 = vpop.f32.mrb[0].mxu0
        %v1640 = vadd.f32 %v1395, %v1639
        %v1641 = vpop.f32.mrb[0].mxu0
        %1642 = vmatprep.mubr.bf16.mxu0 0
        %1643 = vmatmul.mubr.bf16.gmra.mrb[0].mxu0 %v1538
        %v1644 = vpop.f32.mrb[0].mxu0
        %v1645 = vadd.f32 %v1400, %v1644
        %v1646 = vpop.f32.mrb[0].mxu0
        %v1647 = vpop.f32.mrb[0].mxu0
        %v1648 = vadd.f32 %v1403, %v1647
        %v1649 = vpop.f32.mrb[0].mxu0
        %1650 = vmatprep.mubr.bf16.mxu0 0
        %1651 = vmatmul.mubr.bf16.gmra.mrb[0].mxu0 %v1541
        %v1652 = vpop.f32.mrb[0].mxu0
        %v1653 = vadd.f32 %v1408, %v1652
        %v1654 = vpop.f32.mrb[0].mxu0
        %v1655 = vpop.f32.mrb[0].mxu0
        %v1656 = vadd.f32 %v1411, %v1655
        %v1657 = vpop.f32.mrb[0].mxu0
        %1658 = vmatprep.mubr.bf16.mxu0 0
        %1659 = vmatmul.mubr.bf16.gmra.mrb[0].mxu0 %v1544
        %v1660 = vpop.f32.mrb[0].mxu0
        %v1661 = vadd.f32 %v1416, %v1660
        %v1662 = vpop.f32.mrb[0].mxu0
        %v1663 = vpop.f32.mrb[0].mxu0
        %v1664 = vadd.f32 %v1419, %v1663
        %v1665 = vpop.f32.mrb[0].mxu0
        %1666 = vmatprep.mubr.bf16.mxu0 0
        %1667 = vmatmul.mubr.bf16.gmra.mrb[0].mxu0 %v1547
        %v1668 = vpop.f32.mrb[0].mxu0
        %v1669 = vadd.f32 %v1424, %v1668
        %v1670 = vpop.f32.mrb[0].mxu0
        %v1671 = vpop.f32.mrb[0].mxu0
        %v1672 = vadd.f32 %v1427, %v1671
        %v1673 = vpop.f32.mrb[0].mxu0
        %1674 = vmatprep.mubr.bf16.mxu0 0
        %1675 = vmatmul.mubr.bf16.gmra.mrb[0].mxu0 %v1550
        %v1676 = vpop.f32.mrb[0].mxu0
        %v1677 = vadd.f32 %v1432, %v1676
        %v1678 = vpop.f32.mrb[0].mxu0
        %v1679 = vpop.f32.mrb[0].mxu0
        %v1680 = vadd.f32 %v1435, %v1679
        %v1681 = vpop.f32.mrb[0].mxu0
        %1682 = vmatprep.mubr.bf16.mxu0 0
        %1683 = vmatmul.mubr.bf16.gmra.mrb[0].mxu0 %v1553
        %v1684 = vpop.f32.mrb[0].mxu0
        %v1685 = vadd.f32 %v1440, %v1684
        %v1686 = vpop.f32.mrb[0].mxu0
        %v1687 = vpop.f32.mrb[0].mxu0
        %v1688 = vadd.f32 %v1443, %v1687
        %v1689 = vpop.f32.mrb[0].mxu0
        %1690 = vmatprep.mubr.bf16.mxu0 0
        %1691 = vmatmul.mubr.bf16.gmra.mrb[0].mxu0 %v1556
        %v1692 = vpop.f32.mrb[0].mxu0
        %v1693 = vadd.f32 %v1448, %v1692
        %v1694 = vpop.f32.mrb[0].mxu0
        %v1695 = vpop.f32.mrb[0].mxu0
        %v1696 = vadd.f32 %v1451, %v1695
        %v1697 = vpop.f32.mrb[0].mxu0
        %1698 = vmatprep.mubr.bf16.mxu0 0
        %1699 = vmatmul.mubr.bf16.gmra.mrb[0].mxu0 %v1559
        %v1700 = vpop.f32.mrb[0].mxu0
        %v1701 = vadd.f32 %v1456, %v1700
        %v1702 = vpop.f32.mrb[0].mxu0
        %v1703 = vpop.f32.mrb[0].mxu0
        %v1704 = vadd.f32 %v1459, %v1703
        %v1705 = vpop.f32.mrb[0].mxu0
        %1706 = vmatprep.mubr.bf16.mxu0 0
        %1707 = vmatmul.mubr.bf16.gmra.mrb[0].mxu0 %v1562
        %v1708 = vpop.f32.mrb[0].mxu0
        %v1709 = vadd.f32 %v1464, %v1708
        %v1710 = vpop.f32.mrb[0].mxu0
        %v1711 = vpop.f32.mrb[0].mxu0
        %v1712 = vadd.f32 %v1467, %v1711
        %v1713 = vpop.f32.mrb[0].mxu0
        %1714 = vmatprep.mubr.bf16.mxu0 0
        %1715 = vmatmul.mubr.bf16.gmra.mrb[0].mxu0 %v1565
        %v1716 = vpop.f32.mrb[0].mxu0
        %v1717 = vadd.f32 %v1472, %v1716
        %v1718 = vpop.f32.mrb[0].mxu0
        %v1719 = vpop.f32.mrb[0].mxu0
        %v1720 = vadd.f32 %v1475, %v1719
        %v1721 = vpop.f32.mrb[0].mxu0
        %1722 = vmatprep.mubr.bf16.mxu0 0
        %1723 = vmatmul.mubr.bf16.gmra.mrb[0].mxu0 %v1568
        %v1724 = vpop.f32.mrb[0].mxu0
        %v1725 = vadd.f32 %v1480, %v1724
        %v1726 = vpop.f32.mrb[0].mxu0
        %v1727 = vpop.f32.mrb[0].mxu0
        %v1728 = vadd.f32 %v1483, %v1727
        %v1729 = vpop.f32.mrb[0].mxu0
        %1730 = vdwg.mxu0
        %s1731 = scalar_lea.vmem [#allocation2], 16
        %v1732 = vld [vmem:[%s1731] sm:$0xff]
        %v1733 = vld [vmem:[%s1731 + $0x8] sm:$0xff]
        %v1734 = vld [vmem:[%s1731 + $0x10] sm:$0xff]
        %v1735 = vld [vmem:[%s1731 + $0x18] sm:$0xff]
        %v1736 = vld [vmem:[%s1731 + $0x20] sm:$0xff]
        %v1737 = vld [vmem:[%s1731 + $0x28] sm:$0xff]
        %v1738 = vld [vmem:[%s1731 + $0x30] sm:$0xff]
        %v1739 = vld [vmem:[%s1731 + $0x38] sm:$0xff]
        %v1740 = vld [vmem:[%s1731 + $0x40] sm:$0xff]
        %v1741 = vld [vmem:[%s1731 + $0x48] sm:$0xff]
        %v1742 = vld [vmem:[%s1731 + $0x50] sm:$0xff]
        %v1743 = vld [vmem:[%s1731 + $0x58] sm:$0xff]
        %v1744 = vld [vmem:[%s1731 + $0x60] sm:$0xff]
        %v1745 = vld [vmem:[%s1731 + $0x68] sm:$0xff]
        %v1746 = vld [vmem:[%s1731 + $0x70] sm:$0xff]
        %v1747 = vld [vmem:[%s1731 + $0x78] sm:$0xff]
        %s1748 = scalar_lea.vmem %s3, 96
        %v1749 = vld [vmem:[%s1748] sm:$0xf]
        %v1750 = vld [vmem:[%s1748 + $0x4] sm:$0xf]
        %v1751 = vld [vmem:[%s1748 + $0x8] sm:$0xf]
        %v1752 = vld [vmem:[%s1748 + $0xc] sm:$0xf]
        %v1753 = vld [vmem:[%s1748 + $0x10] sm:$0xf]
        %v1754 = vld [vmem:[%s1748 + $0x14] sm:$0xf]
        %v1755 = vld [vmem:[%s1748 + $0x18] sm:$0xf]
        %v1756 = vld [vmem:[%s1748 + $0x1c] sm:$0xf]
        %v1757 = vld [vmem:[%s1748 + $0x20] sm:$0xf]
        %v1758 = vld [vmem:[%s1748 + $0x24] sm:$0xf]
        %v1759 = vld [vmem:[%s1748 + $0x28] sm:$0xf]
        %v1760 = vld [vmem:[%s1748 + $0x2c] sm:$0xf]
        %v1773 = vunpack.c.l.b16 %v1749
        %v1774 = vunpack.c.l.b16 %v1750
        %v1775 = vunpack.c.l.b16 %v1751
        %v1776 = vunpack.c.l.b16 %v1752
        %v1777 = vunpack.c.l.b16 %v1753
        %v1778 = vunpack.c.l.b16 %v1754
        %v1779 = vunpack.c.l.b16 %v1755
        %v1780 = vunpack.c.l.b16 %v1756
        %v1781 = vunpack.c.l.b16 %v1757
        %v1782 = vunpack.c.l.b16 %v1758
        %v1783 = vunpack.c.l.b16 %v1759
        %v1784 = vunpack.c.l.b16 %v1760
        %v1785 = vpack.c.b16 %v1774, %v1773
        %v1786 = vpack.c.b16 %v1776, %v1775
        %v1787 = vpack.c.b16 %v1778, %v1777
        %v1788 = vpack.c.b16 %v1780, %v1779
        %v1789 = vpack.c.b16 %v1782, %v1781
        %v1790 = vpack.c.b16 %v1784, %v1783
        %v1798 = vsel %vm686, %v1732, 0
        %v1801 = vsel %vm686, %v1733, 0
        %v1804 = vsel %vm686, %v1734, 0
        %v1807 = vsel %vm686, %v1735, 0
        %v1810 = vsel %vm686, %v1736, 0
        %v1813 = vsel %vm686, %v1737, 0
        %v1816 = vsel %vm686, %v1738, 0
        %v1819 = vsel %vm686, %v1739, 0
        %v1822 = vsel %vm686, %v1740, 0
        %v1825 = vsel %vm686, %v1741, 0
        %v1828 = vsel %vm686, %v1742, 0
        %v1831 = vsel %vm686, %v1743, 0
        %v1834 = vsel %vm686, %v1744, 0
        %v1837 = vsel %vm686, %v1745, 0
        %v1840 = vsel %vm686, %v1746, 0
        %v1843 = vsel %vm686, %v1747, 0
        %1845 = vmatprep.subr.bf16.mxu0 0
        %1846 = vmatpush1.bf16.msra.mxu0 %v1785
        %1847 = vmatprep.subr.bf16.mxu0 0
        %1848 = vmatpush1.bf16.msra.mxu0 %v1786
        %1849 = vmatprep.subr.bf16.mxu0 0
        %1850 = vmatpush1.bf16.msra.mxu0 %v1787
        %1851 = vmatprep.subr.bf16.mxu0 0
        %1852 = vmatpush1.bf16.msra.mxu0 %v1788
        %1853 = vmatprep.subr.bf16.mxu0 0
        %1854 = vmatpush1.bf16.msra.mxu0 %v1789
        %1855 = vmatprep.subr.bf16.mxu0 0
        %1856 = vmatpush1.bf16.msra.mxu0 %v1790
        %1857 = vmatprep.subr.bf16.mxu0 0
        %1858 = vmatpush1.bf16.msra.mxu0 0
        %1859 = vmatprep.subr.bf16.mxu0 0
        %1860 = vmatpush1.bf16.msra.mxu0 0
        %1861 = vmatprep.subr.bf16.mxu0 0
        %1862 = vmatpush1.bf16.msra.mxu0 0
        %1863 = vmatprep.subr.bf16.mxu0 0
        %1864 = vmatpush1.bf16.msra.mxu0 0
        %1865 = vmatprep.subr.bf16.mxu0 0
        %1866 = vmatpush1.bf16.msra.mxu0 0
        %1867 = vmatprep.subr.bf16.mxu0 0
        %1868 = vmatpush1.bf16.msra.mxu0 0
        %1869 = vmatprep.subr.bf16.mxu0 0
        %1870 = vmatpush1.bf16.msra.mxu0 0
        %1871 = vmatprep.subr.bf16.mxu0 0
        %1872 = vmatpush1.bf16.msra.mxu0 0
        %1873 = vmatprep.subr.bf16.mxu0 0
        %1874 = vmatpush1.bf16.msra.mxu0 0
        %1875 = vmatprep.subr.bf16.mxu0 0
        %1876 = vmatpush1.bf16.msra.mxu0 0
        %1877 = vmatprep.mubr.bf16.mxu0 0
        %1878 = vmatmul.mubr.bf16.gmra.mrb[0].mxu0 %v1798
        %v1879 = vpop.f32.mrb[0].mxu0
        %v1880 = vadd.f32 0.0, %v1879
        %v1881 = vpop.f32.mrb[0].mxu0
        %v1882 = vpop.f32.mrb[0].mxu0
        %v1883 = vadd.f32 0.0, %v1882
        %v1884 = vpop.f32.mrb[0].mxu0
        %1885 = vmatprep.mubr.bf16.mxu0 0
        %1886 = vmatmul.mubr.bf16.gmra.mrb[0].mxu0 %v1801
        %v1887 = vpop.f32.mrb[0].mxu0
        %v1888 = vadd.f32 0.0, %v1887
        %v1889 = vpop.f32.mrb[0].mxu0
        %v1890 = vpop.f32.mrb[0].mxu0
        %v1891 = vadd.f32 0.0, %v1890
        %v1892 = vpop.f32.mrb[0].mxu0
        %1893 = vmatprep.mubr.bf16.mxu0 0
        %1894 = vmatmul.mubr.bf16.gmra.mrb[0].mxu0 %v1804
        %v1895 = vpop.f32.mrb[0].mxu0
        %v1896 = vadd.f32 0.0, %v1895
        %v1897 = vpop.f32.mrb[0].mxu0
        %v1898 = vpop.f32.mrb[0].mxu0
        %v1899 = vadd.f32 0.0, %v1898
        %v1900 = vpop.f32.mrb[0].mxu0
        %1901 = vmatprep.mubr.bf16.mxu0 0
        %1902 = vmatmul.mubr.bf16.gmra.mrb[0].mxu0 %v1807
        %v1903 = vpop.f32.mrb[0].mxu0
        %v1904 = vadd.f32 0.0, %v1903
        %v1905 = vpop.f32.mrb[0].mxu0
        %v1906 = vpop.f32.mrb[0].mxu0
        %v1907 = vadd.f32 0.0, %v1906
        %v1908 = vpop.f32.mrb[0].mxu0
        %1909 = vmatprep.mubr.bf16.mxu0 0
        %1910 = vmatmul.mubr.bf16.gmra.mrb[0].mxu0 %v1810
        %v1911 = vpop.f32.mrb[0].mxu0
        %v1912 = vadd.f32 0.0, %v1911
        %v1913 = vpop.f32.mrb[0].mxu0
        %v1914 = vpop.f32.mrb[0].mxu0
        %v1915 = vadd.f32 0.0, %v1914
        %v1916 = vpop.f32.mrb[0].mxu0
        %1917 = vmatprep.mubr.bf16.mxu0 0
        %1918 = vmatmul.mubr.bf16.gmra.mrb[0].mxu0 %v1813
        %v1919 = vpop.f32.mrb[0].mxu0
        %v1920 = vadd.f32 0.0, %v1919
        %v1921 = vpop.f32.mrb[0].mxu0
        %v1922 = vpop.f32.mrb[0].mxu0
        %v1923 = vadd.f32 0.0, %v1922
        %v1924 = vpop.f32.mrb[0].mxu0
        %1925 = vmatprep.mubr.bf16.mxu0 0
        %1926 = vmatmul.mubr.bf16.gmra.mrb[0].mxu0 %v1816
        %v1927 = vpop.f32.mrb[0].mxu0
        %v1928 = vadd.f32 0.0, %v1927
        %v1929 = vpop.f32.mrb[0].mxu0
        %v1930 = vpop.f32.mrb[0].mxu0
        %v1931 = vadd.f32 0.0, %v1930
        %v1932 = vpop.f32.mrb[0].mxu0
        %1933 = vmatprep.mubr.bf16.mxu0 0
        %1934 = vmatmul.mubr.bf16.gmra.mrb[0].mxu0 %v1819
        %v1935 = vpop.f32.mrb[0].mxu0
        %v1936 = vadd.f32 0.0, %v1935
        %v1937 = vpop.f32.mrb[0].mxu0
        %v1938 = vpop.f32.mrb[0].mxu0
        %v1939 = vadd.f32 0.0, %v1938
        %v1940 = vpop.f32.mrb[0].mxu0
        %1941 = vmatprep.mubr.bf16.mxu0 0
        %1942 = vmatmul.mubr.bf16.gmra.mrb[0].mxu0 %v1822
        %v1943 = vpop.f32.mrb[0].mxu0
        %v1944 = vadd.f32 0.0, %v1943
        %v1945 = vpop.f32.mrb[0].mxu0
        %v1946 = vpop.f32.mrb[0].mxu0
        %v1947 = vadd.f32 0.0, %v1946
        %v1948 = vpop.f32.mrb[0].mxu0
        %1949 = vmatprep.mubr.bf16.mxu0 0
        %1950 = vmatmul.mubr.bf16.gmra.mrb[0].mxu0 %v1825
        %v1951 = vpop.f32.mrb[0].mxu0
        %v1952 = vadd.f32 0.0, %v1951
        %v1953 = vpop.f32.mrb[0].mxu0
        %v1954 = vpop.f32.mrb[0].mxu0
        %v1955 = vadd.f32 0.0, %v1954
        %v1956 = vpop.f32.mrb[0].mxu0
        %1957 = vmatprep.mubr.bf16.mxu0 0
        %1958 = vmatmul.mubr.bf16.gmra.mrb[0].mxu0 %v1828
        %v1959 = vpop.f32.mrb[0].mxu0
        %v1960 = vadd.f32 0.0, %v1959
        %v1961 = vpop.f32.mrb[0].mxu0
        %v1962 = vpop.f32.mrb[0].mxu0
        %v1963 = vadd.f32 0.0, %v1962
        %v1964 = vpop.f32.mrb[0].mxu0
        %1965 = vmatprep.mubr.bf16.mxu0 0
        %1966 = vmatmul.mubr.bf16.gmra.mrb[0].mxu0 %v1831
        %v1967 = vpop.f32.mrb[0].mxu0
        %v1968 = vadd.f32 0.0, %v1967
        %v1969 = vpop.f32.mrb[0].mxu0
        %v1970 = vpop.f32.mrb[0].mxu0
        %v1971 = vadd.f32 0.0, %v1970
        %v1972 = vpop.f32.mrb[0].mxu0
        %1973 = vmatprep.mubr.bf16.mxu0 0
        %1974 = vmatmul.mubr.bf16.gmra.mrb[0].mxu0 %v1834
        %v1975 = vpop.f32.mrb[0].mxu0
        %v1976 = vadd.f32 0.0, %v1975
        %v1977 = vpop.f32.mrb[0].mxu0
        %v1978 = vpop.f32.mrb[0].mxu0
        %v1979 = vadd.f32 0.0, %v1978
        %v1980 = vpop.f32.mrb[0].mxu0
        %1981 = vmatprep.mubr.bf16.mxu0 0
        %1982 = vmatmul.mubr.bf16.gmra.mrb[0].mxu0 %v1837
        %v1983 = vpop.f32.mrb[0].mxu0
        %v1984 = vadd.f32 0.0, %v1983
        %v1985 = vpop.f32.mrb[0].mxu0
        %v1986 = vpop.f32.mrb[0].mxu0
        %v1987 = vadd.f32 0.0, %v1986
        %v1988 = vpop.f32.mrb[0].mxu0
        %1989 = vmatprep.mubr.bf16.mxu0 0
        %1990 = vmatmul.mubr.bf16.gmra.mrb[0].mxu0 %v1840
        %v1991 = vpop.f32.mrb[0].mxu0
        %v1992 = vadd.f32 0.0, %v1991
        %v1993 = vpop.f32.mrb[0].mxu0
        %v1994 = vpop.f32.mrb[0].mxu0
        %v1995 = vadd.f32 0.0, %v1994
        %v1996 = vpop.f32.mrb[0].mxu0
        %1997 = vmatprep.mubr.bf16.mxu0 0
        %1998 = vmatmul.mubr.bf16.gmra.mrb[0].mxu0 %v1843
        %v1999 = vpop.f32.mrb[0].mxu0
        %v2000 = vadd.f32 0.0, %v1999
        %v2001 = vpop.f32.mrb[0].mxu0
        %v2002 = vpop.f32.mrb[0].mxu0
        %v2003 = vadd.f32 0.0, %v2002
        %v2004 = vpop.f32.mrb[0].mxu0
        %2005 = vdwg.mxu0
        %v2006 = vadd.f32 %v1605, %v1880
        %v2007 = vadd.f32 %v1608, %v1883
        %v2008 = vadd.f32 %v1613, %v1888
        %v2009 = vadd.f32 %v1616, %v1891
        %v2010 = vadd.f32 %v1621, %v1896
        %v2011 = vadd.f32 %v1624, %v1899
        %v2012 = vadd.f32 %v1629, %v1904
        %v2013 = vadd.f32 %v1632, %v1907
        %v2014 = vadd.f32 %v1637, %v1912
        %v2015 = vadd.f32 %v1640, %v1915
        %v2016 = vadd.f32 %v1645, %v1920
        %v2017 = vadd.f32 %v1648, %v1923
        %v2018 = vadd.f32 %v1653, %v1928
        %v2019 = vadd.f32 %v1656, %v1931
        %v2020 = vadd.f32 %v1661, %v1936
        %v2021 = vadd.f32 %v1664, %v1939
        %v2022 = vadd.f32 %v1669, %v1944
        %v2023 = vadd.f32 %v1672, %v1947
        %v2024 = vadd.f32 %v1677, %v1952
        %v2025 = vadd.f32 %v1680, %v1955
        %v2026 = vadd.f32 %v1685, %v1960
        %v2027 = vadd.f32 %v1688, %v1963
        %v2028 = vadd.f32 %v1693, %v1968
        %v2029 = vadd.f32 %v1696, %v1971
        %v2030 = vadd.f32 %v1701, %v1976
        %v2031 = vadd.f32 %v1704, %v1979
        %v2032 = vadd.f32 %v1709, %v1984
        %v2033 = vadd.f32 %v1712, %v1987
        %v2034 = vadd.f32 %v1717, %v1992
        %v2035 = vadd.f32 %v1720, %v1995
        %v2036 = vadd.f32 %v1725, %v2000
        %v2037 = vadd.f32 %v1728, %v2003
        %v2038 = vld [vmem:[%s4] sm:$0x1]
        %v2040 = vlaneseq
        %v2041 = vshrl.u32 %v2040, 7
        %v2042 = vsub.s32 0, %v2041
        %v2043 = vrot.slane %v2038, %v2042
        %v2045 = vadd.f32 %v2006, %v2043
        %v2046 = vadd.f32 %v2007, %v2043
        %v2047 = vadd.f32 %v2008, %v2043
        %v2048 = vadd.f32 %v2009, %v2043
        %v2049 = vadd.f32 %v2010, %v2043
        %v2050 = vadd.f32 %v2011, %v2043
        %v2051 = vadd.f32 %v2012, %v2043
        %v2052 = vadd.f32 %v2013, %v2043
        %v2053 = vadd.f32 %v2014, %v2043
        %v2054 = vadd.f32 %v2015, %v2043
        %v2055 = vadd.f32 %v2016, %v2043
        %v2056 = vadd.f32 %v2017, %v2043
        %v2057 = vadd.f32 %v2018, %v2043
        %v2058 = vadd.f32 %v2019, %v2043
        %v2059 = vadd.f32 %v2020, %v2043
        %v2060 = vadd.f32 %v2021, %v2043
        %v2061 = vadd.f32 %v2022, %v2043
        %v2062 = vadd.f32 %v2023, %v2043
        %v2063 = vadd.f32 %v2024, %v2043
        %v2064 = vadd.f32 %v2025, %v2043
        %v2065 = vadd.f32 %v2026, %v2043
        %v2066 = vadd.f32 %v2027, %v2043
        %v2067 = vadd.f32 %v2028, %v2043
        %v2068 = vadd.f32 %v2029, %v2043
        %v2069 = vadd.f32 %v2030, %v2043
        %v2070 = vadd.f32 %v2031, %v2043
        %v2071 = vadd.f32 %v2032, %v2043
        %v2072 = vadd.f32 %v2033, %v2043
        %v2073 = vadd.f32 %v2034, %v2043
        %v2074 = vadd.f32 %v2035, %v2043
        %v2075 = vadd.f32 %v2036, %v2043
        %v2076 = vadd.f32 %v2037, %v2043
        %v2077 = vmax.f32 %v2045, 0.0
        %v2078 = vmax.f32 %v2046, 0.0
        %v2079 = vmax.f32 %v2047, 0.0
        %v2080 = vmax.f32 %v2048, 0.0
        %v2081 = vmax.f32 %v2049, 0.0
        %v2082 = vmax.f32 %v2050, 0.0
        %v2083 = vmax.f32 %v2051, 0.0
        %v2084 = vmax.f32 %v2052, 0.0
        %v2085 = vmax.f32 %v2053, 0.0
        %v2086 = vmax.f32 %v2054, 0.0
        %v2087 = vmax.f32 %v2055, 0.0
        %v2088 = vmax.f32 %v2056, 0.0
        %v2089 = vmax.f32 %v2057, 0.0
        %v2090 = vmax.f32 %v2058, 0.0
        %v2091 = vmax.f32 %v2059, 0.0
        %v2092 = vmax.f32 %v2060, 0.0
        %v2093 = vmax.f32 %v2061, 0.0
        %v2094 = vmax.f32 %v2062, 0.0
        %v2095 = vmax.f32 %v2063, 0.0
        %v2096 = vmax.f32 %v2064, 0.0
        %v2097 = vmax.f32 %v2065, 0.0
        %v2098 = vmax.f32 %v2066, 0.0
        %v2099 = vmax.f32 %v2067, 0.0
        %v2100 = vmax.f32 %v2068, 0.0
        %v2101 = vmax.f32 %v2069, 0.0
        %v2102 = vmax.f32 %v2070, 0.0
        %v2103 = vmax.f32 %v2071, 0.0
        %v2104 = vmax.f32 %v2072, 0.0
        %v2105 = vmax.f32 %v2073, 0.0
        %v2106 = vmax.f32 %v2074, 0.0
        %v2107 = vmax.f32 %v2075, 0.0
        %v2108 = vmax.f32 %v2076, 0.0
        %v2109 = vpack.c.bf16 %v2078, %v2077
        %v2110 = vpack.c.bf16 %v2080, %v2079
        %v2111 = vpack.c.bf16 %v2082, %v2081
        %v2112 = vpack.c.bf16 %v2084, %v2083
        %v2113 = vpack.c.bf16 %v2086, %v2085
        %v2114 = vpack.c.bf16 %v2088, %v2087
        %v2115 = vpack.c.bf16 %v2090, %v2089
        %v2116 = vpack.c.bf16 %v2092, %v2091
        %v2117 = vpack.c.bf16 %v2094, %v2093
        %v2118 = vpack.c.bf16 %v2096, %v2095
        %v2119 = vpack.c.bf16 %v2098, %v2097
        %v2120 = vpack.c.bf16 %v2100, %v2099
        %v2121 = vpack.c.bf16 %v2102, %v2101
        %v2122 = vpack.c.bf16 %v2104, %v2103
        %v2123 = vpack.c.bf16 %v2106, %v2105
        %v2124 = vpack.c.bf16 %v2108, %v2107
        %v2125 = vld [vmem:[%s5] sm:$0xf]
        %v2126 = vld [vmem:[%s5 + $0x4] sm:$0xf]
        %v2127 = vld [vmem:[%s5 + $0x8] sm:$0xf]
        %v2128 = vld [vmem:[%s5 + $0xc] sm:$0xf]
        %v2129 = vld [vmem:[%s6] sm:$0x1]
        %v2131 = vlaneseq
        %v2132 = vshrl.u32 %v2131, 7
        %v2133 = vsub.s32 0, %v2132
        %v2134 = vrot.slane %v2129, %v2133
        %v2140 = vunpack.c.l.b16 %v2125
        %v2141 = vunpack.c.l.b16 %v2126
        %v2142 = vunpack.c.l.b16 %v2127
        %v2143 = vunpack.c.l.b16 %v2128
        %v2144 = vpack.c.b16 %v2141, %v2140
        %v2145 = vpack.c.b16 %v2143, %v2142
        %vm2148 = vcmask 261120
        %v2150 = vsel %vm2148, %v2109, 0
        %v2153 = vsel %vm2148, %v2110, 0
        %v2156 = vsel %vm2148, %v2111, 0
        %v2159 = vsel %vm2148, %v2112, 0
        %v2162 = vsel %vm2148, %v2113, 0
        %v2165 = vsel %vm2148, %v2114, 0
        %v2168 = vsel %vm2148, %v2115, 0
        %v2171 = vsel %vm2148, %v2116, 0
        %v2174 = vsel %vm2148, %v2117, 0
        %v2177 = vsel %vm2148, %v2118, 0
        %v2180 = vsel %vm2148, %v2119, 0
        %v2183 = vsel %vm2148, %v2120, 0
        %v2186 = vsel %vm2148, %v2121, 0
        %v2189 = vsel %vm2148, %v2122, 0
        %v2192 = vsel %vm2148, %v2123, 0
        %v2195 = vsel %vm2148, %v2124, 0
        %2197 = vmatprep.subr.bf16.mxu0 0
        %2198 = vmatpush1.bf16.msra.mxu0 %v2144
        %2199 = vmatprep.subr.bf16.mxu0 0
        %2200 = vmatpush1.bf16.msra.mxu0 %v2145
        %2201 = vmatprep.subr.bf16.mxu0 0
        %2202 = vmatpush1.bf16.msra.mxu0 0
        %2203 = vmatprep.subr.bf16.mxu0 0
        %2204 = vmatpush1.bf16.msra.mxu0 0
        %2205 = vmatprep.subr.bf16.mxu0 0
        %2206 = vmatpush1.bf16.msra.mxu0 0
        %2207 = vmatprep.subr.bf16.mxu0 0
        %2208 = vmatpush1.bf16.msra.mxu0 0
        %2209 = vmatprep.subr.bf16.mxu0 0
        %2210 = vmatpush1.bf16.msra.mxu0 0
        %2211 = vmatprep.subr.bf16.mxu0 0
        %2212 = vmatpush1.bf16.msra.mxu0 0
        %2213 = vmatprep.subr.bf16.mxu0 0
        %2214 = vmatpush1.bf16.msra.mxu0 0
        %2215 = vmatprep.subr.bf16.mxu0 0
        %2216 = vmatpush1.bf16.msra.mxu0 0
        %2217 = vmatprep.subr.bf16.mxu0 0
        %2218 = vmatpush1.bf16.msra.mxu0 0
        %2219 = vmatprep.subr.bf16.mxu0 0
        %2220 = vmatpush1.bf16.msra.mxu0 0
        %2221 = vmatprep.subr.bf16.mxu0 0
        %2222 = vmatpush1.bf16.msra.mxu0 0
        %2223 = vmatprep.subr.bf16.mxu0 0
        %2224 = vmatpush1.bf16.msra.mxu0 0
        %2225 = vmatprep.subr.bf16.mxu0 0
        %2226 = vmatpush1.bf16.msra.mxu0 0
        %2227 = vmatprep.subr.bf16.mxu0 0
        %2228 = vmatpush1.bf16.msra.mxu0 0
        %2229 = vmatprep.mubr.bf16.mxu0 0
        %2230 = vmatmul.mubr.bf16.gmra.mrb[0].mxu0 %v2150
        %v2231 = vpop.f32.mrb[0].mxu0
        %v2232 = vadd.f32 %v2134, %v2231
        %v2233 = vpop.f32.mrb[0].mxu0
        %v2234 = vpop.f32.mrb[0].mxu0
        %v2235 = vadd.f32 %v2134, %v2234
        %v2236 = vpop.f32.mrb[0].mxu0
        %2237 = vmatprep.mubr.bf16.mxu0 0
        %2238 = vmatmul.mubr.bf16.gmra.mrb[0].mxu0 %v2153
        %v2239 = vpop.f32.mrb[0].mxu0
        %v2240 = vadd.f32 %v2134, %v2239
        %v2241 = vpop.f32.mrb[0].mxu0
        %v2242 = vpop.f32.mrb[0].mxu0
        %v2243 = vadd.f32 %v2134, %v2242
        %v2244 = vpop.f32.mrb[0].mxu0
        %2245 = vmatprep.mubr.bf16.mxu0 0
        %2246 = vmatmul.mubr.bf16.gmra.mrb[0].mxu0 %v2156
        %v2247 = vpop.f32.mrb[0].mxu0
        %v2248 = vadd.f32 %v2134, %v2247
        %v2249 = vpop.f32.mrb[0].mxu0
        %v2250 = vpop.f32.mrb[0].mxu0
        %v2251 = vadd.f32 %v2134, %v2250
        %v2252 = vpop.f32.mrb[0].mxu0
        %2253 = vmatprep.mubr.bf16.mxu0 0
        %2254 = vmatmul.mubr.bf16.gmra.mrb[0].mxu0 %v2159
        %v2255 = vpop.f32.mrb[0].mxu0
        %v2256 = vadd.f32 %v2134, %v2255
        %v2257 = vpop.f32.mrb[0].mxu0
        %v2258 = vpop.f32.mrb[0].mxu0
        %v2259 = vadd.f32 %v2134, %v2258
        %v2260 = vpop.f32.mrb[0].mxu0
        %2261 = vmatprep.mubr.bf16.mxu0 0
        %2262 = vmatmul.mubr.bf16.gmra.mrb[0].mxu0 %v2162
        %v2263 = vpop.f32.mrb[0].mxu0
        %v2264 = vadd.f32 %v2134, %v2263
        %v2265 = vpop.f32.mrb[0].mxu0
        %v2266 = vpop.f32.mrb[0].mxu0
        %v2267 = vadd.f32 %v2134, %v2266
        %v2268 = vpop.f32.mrb[0].mxu0
        %2269 = vmatprep.mubr.bf16.mxu0 0
        %2270 = vmatmul.mubr.bf16.gmra.mrb[0].mxu0 %v2165
        %v2271 = vpop.f32.mrb[0].mxu0
        %v2272 = vadd.f32 %v2134, %v2271
        %v2273 = vpop.f32.mrb[0].mxu0
        %v2274 = vpop.f32.mrb[0].mxu0
        %v2275 = vadd.f32 %v2134, %v2274
        %v2276 = vpop.f32.mrb[0].mxu0
        %2277 = vmatprep.mubr.bf16.mxu0 0
        %2278 = vmatmul.mubr.bf16.gmra.mrb[0].mxu0 %v2168
        %v2279 = vpop.f32.mrb[0].mxu0
        %v2280 = vadd.f32 %v2134, %v2279
        %v2281 = vpop.f32.mrb[0].mxu0
        %v2282 = vpop.f32.mrb[0].mxu0
        %v2283 = vadd.f32 %v2134, %v2282
        %v2284 = vpop.f32.mrb[0].mxu0
        %2285 = vmatprep.mubr.bf16.mxu0 0
        %2286 = vmatmul.mubr.bf16.gmra.mrb[0].mxu0 %v2171
        %v2287 = vpop.f32.mrb[0].mxu0
        %v2288 = vadd.f32 %v2134, %v2287
        %v2289 = vpop.f32.mrb[0].mxu0
        %v2290 = vpop.f32.mrb[0].mxu0
        %v2291 = vadd.f32 %v2134, %v2290
        %v2292 = vpop.f32.mrb[0].mxu0
        %2293 = vmatprep.mubr.bf16.mxu0 0
        %2294 = vmatmul.mubr.bf16.gmra.mrb[0].mxu0 %v2174
        %v2295 = vpop.f32.mrb[0].mxu0
        %v2296 = vadd.f32 %v2134, %v2295
        %v2297 = vpop.f32.mrb[0].mxu0
        %v2298 = vpop.f32.mrb[0].mxu0
        %v2299 = vadd.f32 %v2134, %v2298
        %v2300 = vpop.f32.mrb[0].mxu0
        %2301 = vmatprep.mubr.bf16.mxu0 0
        %2302 = vmatmul.mubr.bf16.gmra.mrb[0].mxu0 %v2177
        %v2303 = vpop.f32.mrb[0].mxu0
        %v2304 = vadd.f32 %v2134, %v2303
        %v2305 = vpop.f32.mrb[0].mxu0
        %v2306 = vpop.f32.mrb[0].mxu0
        %v2307 = vadd.f32 %v2134, %v2306
        %v2308 = vpop.f32.mrb[0].mxu0
        %2309 = vmatprep.mubr.bf16.mxu0 0
        %2310 = vmatmul.mubr.bf16.gmra.mrb[0].mxu0 %v2180
        %v2311 = vpop.f32.mrb[0].mxu0
        %v2312 = vadd.f32 %v2134, %v2311
        %v2313 = vpop.f32.mrb[0].mxu0
        %v2314 = vpop.f32.mrb[0].mxu0
        %v2315 = vadd.f32 %v2134, %v2314
        %v2316 = vpop.f32.mrb[0].mxu0
        %2317 = vmatprep.mubr.bf16.mxu0 0
        %2318 = vmatmul.mubr.bf16.gmra.mrb[0].mxu0 %v2183
        %v2319 = vpop.f32.mrb[0].mxu0
        %v2320 = vadd.f32 %v2134, %v2319
        %v2321 = vpop.f32.mrb[0].mxu0
        %v2322 = vpop.f32.mrb[0].mxu0
        %v2323 = vadd.f32 %v2134, %v2322
        %v2324 = vpop.f32.mrb[0].mxu0
        %2325 = vmatprep.mubr.bf16.mxu0 0
        %2326 = vmatmul.mubr.bf16.gmra.mrb[0].mxu0 %v2186
        %v2327 = vpop.f32.mrb[0].mxu0
        %v2328 = vadd.f32 %v2134, %v2327
        %v2329 = vpop.f32.mrb[0].mxu0
        %v2330 = vpop.f32.mrb[0].mxu0
        %v2331 = vadd.f32 %v2134, %v2330
        %v2332 = vpop.f32.mrb[0].mxu0
        %2333 = vmatprep.mubr.bf16.mxu0 0
        %2334 = vmatmul.mubr.bf16.gmra.mrb[0].mxu0 %v2189
        %v2335 = vpop.f32.mrb[0].mxu0
        %v2336 = vadd.f32 %v2134, %v2335
        %v2337 = vpop.f32.mrb[0].mxu0
        %v2338 = vpop.f32.mrb[0].mxu0
        %v2339 = vadd.f32 %v2134, %v2338
        %v2340 = vpop.f32.mrb[0].mxu0
        %2341 = vmatprep.mubr.bf16.mxu0 0
        %2342 = vmatmul.mubr.bf16.gmra.mrb[0].mxu0 %v2192
        %v2343 = vpop.f32.mrb[0].mxu0
        %v2344 = vadd.f32 %v2134, %v2343
        %v2345 = vpop.f32.mrb[0].mxu0
        %v2346 = vpop.f32.mrb[0].mxu0
        %v2347 = vadd.f32 %v2134, %v2346
        %v2348 = vpop.f32.mrb[0].mxu0
        %2349 = vmatprep.mubr.bf16.mxu0 0
        %2350 = vmatmul.mubr.bf16.gmra.mrb[0].mxu0 %v2195
        %v2351 = vpop.f32.mrb[0].mxu0
        %v2352 = vadd.f32 %v2134, %v2351
        %v2353 = vpop.f32.mrb[0].mxu0
        %v2354 = vpop.f32.mrb[0].mxu0
        %v2355 = vadd.f32 %v2134, %v2354
        %v2356 = vpop.f32.mrb[0].mxu0
        %2357 = vdwg.mxu0
        %v2358 = vunpack.c.l.bf16 %v278
        %v2359 = vunpack.c.l.bf16 %v279
        %v2360 = vunpack.c.l.bf16 %v280
        %v2361 = vunpack.c.l.bf16 %v281
        %v2362 = vunpack.c.l.bf16 %v282
        %v2363 = vunpack.c.l.bf16 %v283
        %v2364 = vunpack.c.l.bf16 %v284
        %v2365 = vunpack.c.l.bf16 %v285
        %v2366 = vunpack.c.l.bf16 %v286
        %v2367 = vunpack.c.l.bf16 %v287
        %v2368 = vunpack.c.l.bf16 %v288
        %v2369 = vunpack.c.l.bf16 %v289
        %v2370 = vunpack.c.l.bf16 %v290
        %v2371 = vunpack.c.l.bf16 %v291
        %v2372 = vunpack.c.l.bf16 %v292
        %v2373 = vunpack.c.l.bf16 %v293
        %v2374 = vunpack.c.l.bf16 %v294
        %v2375 = vunpack.c.l.bf16 %v295
        %v2376 = vunpack.c.l.bf16 %v296
        %v2377 = vunpack.c.l.bf16 %v297
        %v2378 = vunpack.c.l.bf16 %v298
        %v2379 = vunpack.c.l.bf16 %v299
        %v2380 = vunpack.c.l.bf16 %v300
        %v2381 = vunpack.c.l.bf16 %v301
        %v2382 = vunpack.c.l.bf16 %v302
        %v2383 = vunpack.c.l.bf16 %v303
        %v2384 = vunpack.c.l.bf16 %v304
        %v2385 = vunpack.c.l.bf16 %v305
        %v2386 = vunpack.c.l.bf16 %v306
        %v2387 = vunpack.c.l.bf16 %v307
        %v2388 = vunpack.c.l.bf16 %v308
        %v2389 = vunpack.c.l.bf16 %v309
        %v2390 = vadd.f32 %v2232, %v2358
        %v2391 = vadd.f32 %v2235, %v2359
        %v2392 = vadd.f32 %v2240, %v2360
        %v2393 = vadd.f32 %v2243, %v2361
        %v2394 = vadd.f32 %v2248, %v2362
        %v2395 = vadd.f32 %v2251, %v2363
        %v2396 = vadd.f32 %v2256, %v2364
        %v2397 = vadd.f32 %v2259, %v2365
        %v2398 = vadd.f32 %v2264, %v2366
        %v2399 = vadd.f32 %v2267, %v2367
        %v2400 = vadd.f32 %v2272, %v2368
        %v2401 = vadd.f32 %v2275, %v2369
        %v2402 = vadd.f32 %v2280, %v2370
        %v2403 = vadd.f32 %v2283, %v2371
        %v2404 = vadd.f32 %v2288, %v2372
        %v2405 = vadd.f32 %v2291, %v2373
        %v2406 = vadd.f32 %v2296, %v2374
        %v2407 = vadd.f32 %v2299, %v2375
        %v2408 = vadd.f32 %v2304, %v2376
        %v2409 = vadd.f32 %v2307, %v2377
        %v2410 = vadd.f32 %v2312, %v2378
        %v2411 = vadd.f32 %v2315, %v2379
        %v2412 = vadd.f32 %v2320, %v2380
        %v2413 = vadd.f32 %v2323, %v2381
        %v2414 = vadd.f32 %v2328, %v2382
        %v2415 = vadd.f32 %v2331, %v2383
        %v2416 = vadd.f32 %v2336, %v2384
        %v2417 = vadd.f32 %v2339, %v2385
        %v2418 = vadd.f32 %v2344, %v2386
        %v2419 = vadd.f32 %v2347, %v2387
        %v2420 = vadd.f32 %v2352, %v2388
        %v2421 = vadd.f32 %v2355, %v2389
        %v2422 = vmax.f32 %v2390, 0.0
        %v2423 = vmax.f32 %v2391, 0.0
        %v2424 = vmax.f32 %v2392, 0.0
        %v2425 = vmax.f32 %v2393, 0.0
        %v2426 = vmax.f32 %v2394, 0.0
        %v2427 = vmax.f32 %v2395, 0.0
        %v2428 = vmax.f32 %v2396, 0.0
        %v2429 = vmax.f32 %v2397, 0.0
        %v2430 = vmax.f32 %v2398, 0.0
        %v2431 = vmax.f32 %v2399, 0.0
        %v2432 = vmax.f32 %v2400, 0.0
        %v2433 = vmax.f32 %v2401, 0.0
        %v2434 = vmax.f32 %v2402, 0.0
        %v2435 = vmax.f32 %v2403, 0.0
        %v2436 = vmax.f32 %v2404, 0.0
        %v2437 = vmax.f32 %v2405, 0.0
        %v2438 = vmax.f32 %v2406, 0.0
        %v2439 = vmax.f32 %v2407, 0.0
        %v2440 = vmax.f32 %v2408, 0.0
        %v2441 = vmax.f32 %v2409, 0.0
        %v2442 = vmax.f32 %v2410, 0.0
        %v2443 = vmax.f32 %v2411, 0.0
        %v2444 = vmax.f32 %v2412, 0.0
        %v2445 = vmax.f32 %v2413, 0.0
        %v2446 = vmax.f32 %v2414, 0.0
        %v2447 = vmax.f32 %v2415, 0.0
        %v2448 = vmax.f32 %v2416, 0.0
        %v2449 = vmax.f32 %v2417, 0.0
        %v2450 = vmax.f32 %v2418, 0.0
        %v2451 = vmax.f32 %v2419, 0.0
        %v2452 = vmax.f32 %v2420, 0.0
        %v2453 = vmax.f32 %v2421, 0.0
        %v2454 = vpack.c.bf16 %v2423, %v2422
        %v2455 = vpack.c.bf16 %v2425, %v2424
        %v2456 = vpack.c.bf16 %v2427, %v2426
        %v2457 = vpack.c.bf16 %v2429, %v2428
        %v2458 = vpack.c.bf16 %v2431, %v2430
        %v2459 = vpack.c.bf16 %v2433, %v2432
        %v2460 = vpack.c.bf16 %v2435, %v2434
        %v2461 = vpack.c.bf16 %v2437, %v2436
        %v2462 = vpack.c.bf16 %v2439, %v2438
        %v2463 = vpack.c.bf16 %v2441, %v2440
        %v2464 = vpack.c.bf16 %v2443, %v2442
        %v2465 = vpack.c.bf16 %v2445, %v2444
        %v2466 = vpack.c.bf16 %v2447, %v2446
        %v2467 = vpack.c.bf16 %v2449, %v2448
        %v2468 = vpack.c.bf16 %v2451, %v2450
        %v2469 = vpack.c.bf16 %v2453, %v2452
        %v2486 = vunpack.c.l.b16 %v2454
        %v2487 = vunpack.c.h.b16 %v2454
        %v2488 = vunpack.c.l.b16 %v2455
        %v2489 = vunpack.c.h.b16 %v2455
        %v2490 = vunpack.c.l.b16 %v2456
        %v2491 = vunpack.c.h.b16 %v2456
        %v2492 = vunpack.c.l.b16 %v2457
        %v2493 = vunpack.c.h.b16 %v2457
        %v2494 = vunpack.c.l.b16 %v2458
        %v2495 = vunpack.c.h.b16 %v2458
        %v2496 = vunpack.c.l.b16 %v2459
        %v2497 = vunpack.c.h.b16 %v2459
        %v2498 = vunpack.c.l.b16 %v2460
        %v2499 = vunpack.c.h.b16 %v2460
        %v2500 = vunpack.c.l.b16 %v2461
        %v2501 = vunpack.c.h.b16 %v2461
        %v2502 = vunpack.c.l.b16 %v2462
        %v2503 = vunpack.c.h.b16 %v2462
        %v2504 = vunpack.c.l.b16 %v2463
        %v2505 = vunpack.c.h.b16 %v2463
        %v2506 = vunpack.c.l.b16 %v2464
        %v2507 = vunpack.c.h.b16 %v2464
        %v2508 = vunpack.c.l.b16 %v2465
        %v2509 = vunpack.c.h.b16 %v2465
        %v2510 = vunpack.c.l.b16 %v2466
        %v2511 = vunpack.c.h.b16 %v2466
        %v2512 = vunpack.c.l.b16 %v2467
        %v2513 = vunpack.c.h.b16 %v2467
        %v2514 = vunpack.c.l.b16 %v2468
        %v2515 = vunpack.c.h.b16 %v2468
        %v2516 = vunpack.c.l.b16 %v2469
        %v2517 = vunpack.c.h.b16 %v2469
        %v2518 = vpack.c.b16 %v2486, %v2486
        %v2519 = vpack.c.b16 %v2487, %v2487
        %v2520 = vpack.c.b16 %v2488, %v2488
        %v2521 = vpack.c.b16 %v2489, %v2489
        %v2522 = vpack.c.b16 %v2490, %v2490
        %v2523 = vpack.c.b16 %v2491, %v2491
        %v2524 = vpack.c.b16 %v2492, %v2492
        %v2525 = vpack.c.b16 %v2493, %v2493
        %v2526 = vpack.c.b16 %v2494, %v2494
        %v2527 = vpack.c.b16 %v2495, %v2495
        %v2528 = vpack.c.b16 %v2496, %v2496
        %v2529 = vpack.c.b16 %v2497, %v2497
        %v2530 = vpack.c.b16 %v2498, %v2498
        %v2531 = vpack.c.b16 %v2499, %v2499
        %v2532 = vpack.c.b16 %v2500, %v2500
        %v2533 = vpack.c.b16 %v2501, %v2501
        %v2534 = vpack.c.b16 %v2502, %v2502
        %v2535 = vpack.c.b16 %v2503, %v2503
        %v2536 = vpack.c.b16 %v2504, %v2504
        %v2537 = vpack.c.b16 %v2505, %v2505
        %v2538 = vpack.c.b16 %v2506, %v2506
        %v2539 = vpack.c.b16 %v2507, %v2507
        %v2540 = vpack.c.b16 %v2508, %v2508
        %v2541 = vpack.c.b16 %v2509, %v2509
        %v2542 = vpack.c.b16 %v2510, %v2510
        %v2543 = vpack.c.b16 %v2511, %v2511
        %v2544 = vpack.c.b16 %v2512, %v2512
        %v2545 = vpack.c.b16 %v2513, %v2513
        %v2546 = vpack.c.b16 %v2514, %v2514
        %v2547 = vpack.c.b16 %v2515, %v2515
        %v2548 = vpack.c.b16 %v2516, %v2516
        %v2549 = vpack.c.b16 %v2517, %v2517
        %2582 = vst [vmem:[%s271] sm:$0xf] %v2518
        %2583 = vst [vmem:[%s271 + $0x4] sm:$0xf] %v2519
        %2584 = vst [vmem:[%s271 + $0x8] sm:$0xf] %v2520
        %2585 = vst [vmem:[%s271 + $0xc] sm:$0xf] %v2521
        %2586 = vst [vmem:[%s271 + $0x10] sm:$0xf] %v2522
        %2587 = vst [vmem:[%s271 + $0x14] sm:$0xf] %v2523
        %2588 = vst [vmem:[%s271 + $0x18] sm:$0xf] %v2524
        %2589 = vst [vmem:[%s271 + $0x1c] sm:$0xf] %v2525
        %2590 = vst [vmem:[%s271 + $0x20] sm:$0xf] %v2526
        %2591 = vst [vmem:[%s271 + $0x24] sm:$0xf] %v2527
        %2592 = vst [vmem:[%s271 + $0x28] sm:$0xf] %v2528
        %2593 = vst [vmem:[%s271 + $0x2c] sm:$0xf] %v2529
        %2594 = vst [vmem:[%s271 + $0x30] sm:$0xf] %v2530
        %2595 = vst [vmem:[%s271 + $0x34] sm:$0xf] %v2531
        %2596 = vst [vmem:[%s271 + $0x38] sm:$0xf] %v2532
        %2597 = vst [vmem:[%s271 + $0x3c] sm:$0xf] %v2533
        %2598 = vst [vmem:[%s271 + $0x40] sm:$0xf] %v2534
        %2599 = vst [vmem:[%s271 + $0x44] sm:$0xf] %v2535
        %2600 = vst [vmem:[%s271 + $0x48] sm:$0xf] %v2536
        %2601 = vst [vmem:[%s271 + $0x4c] sm:$0xf] %v2537
        %2602 = vst [vmem:[%s271 + $0x50] sm:$0xf] %v2538
        %2603 = vst [vmem:[%s271 + $0x54] sm:$0xf] %v2539
        %2604 = vst [vmem:[%s271 + $0x58] sm:$0xf] %v2540
        %2605 = vst [vmem:[%s271 + $0x5c] sm:$0xf] %v2541
        %2606 = vst [vmem:[%s271 + $0x60] sm:$0xf] %v2542
        %2607 = vst [vmem:[%s271 + $0x64] sm:$0xf] %v2543
        %2608 = vst [vmem:[%s271 + $0x68] sm:$0xf] %v2544
        %2609 = vst [vmem:[%s271 + $0x6c] sm:$0xf] %v2545
        %2610 = vst [vmem:[%s271 + $0x70] sm:$0xf] %v2546
        %2611 = vst [vmem:[%s271 + $0x74] sm:$0xf] %v2547
        %2612 = vst [vmem:[%s271 + $0x78] sm:$0xf] %v2548
        %2613 = vst [vmem:[%s271 + $0x7c] sm:$0xf] %v2549
        %s2614 = sand.u32 %s181, 1
        %s2615 = scalar_lea.sflag [#allocation4], %s2614
        %s2616 = sand.u32 %s181, 1
        %s2617 = smul.addr %s2616, 128
        %s2618 = scalar_lea.vmem [#allocation3], %s2617
        // Predicated region
        $region49: #{tpu_custom_call.1} parent=47 // pred_check
          %p2619 = pneg %p191
        $region50: #{tpu_custom_call.1} parent=47 // pred_check_branch
          %2621 = sbr.rel (%p2619) target = $region52
        $region51: #{tpu_custom_call.1} parent=47 // pred_region
          %s2623 = ssub.s32 2048, 2048
          %2624 = vsyncadd %s2615, %s2623
          %s2625 = smul.addr %s21, 32
          %s2626 = smul.addr %s2625, 64
          %s2627 = scalar_lea.hbm %s7, %s2626
          %s2628 = sshll.u32 %s2618, 4
          %s2629 = int_to_ptr.vmem [resolvable:$true] %s2628
          %2634 = dma.vmem_to_hbm [thread:$0]  %s2629, 2048, %s2627, %s2615, 64, 64, 4
        $region52: #{tpu_custom_call.1} parent=47 // pred_fallthru
          _
      $region48: #{tpu_custom_call.1} parent=5 // pred_fallthru
        _
      %p2635 = scmp.le.s32.totalorder 2, %s16
      // Predicated region
      $region53: #{tpu_custom_call.1} parent=5 // pred_check
        %p2636 = pneg %p2635
      $region54: #{tpu_custom_call.1} parent=5 // pred_check_branch
        %2638 = sbr.rel (%p2636) target = $region56
      $region55: #{tpu_custom_call.1} parent=5 // pred_region
        %s2639 = ssub.s32 %s16, 2
        // Predicated region
        $region57: #{tpu_custom_call.1} parent=55 // pred_check
          %p2640 = pneg %p197
        $region58: #{tpu_custom_call.1} parent=55 // pred_check_branch
          %2642 = sbr.rel (%p2640) target = $region60
        $region59: #{tpu_custom_call.1} parent=55 // pred_region
          %s2643 = sand.u32 %s182, 1
          %s2644 = scalar_lea.sflag [#allocation4], %s2643
          %s2645 = sand.u32 %s182, 1
          %s2646 = smul.addr %s2645, 128
          %s2647 = scalar_lea.vmem [#allocation3], %s2646
          %2648 = dma.done %s2644, 2048
        $region60: #{tpu_custom_call.1} parent=55 // pred_fallthru
          _
      $region56: #{tpu_custom_call.1} parent=5 // pred_fallthru
        _
    $region6: #{tpu_custom_call.1} parent=1 // loop_footer
      %s20 = sadd.s32 1, %s16
    $region7: #{tpu_custom_call.1} parent=1 // loop_footer_branch
      %15 = sbr.rel target = $region3
    $region8: #{tpu_custom_call.1} parent=1 // loop_exit
      _
    %2649 = vsyncpa [#allocation4], 1
    %s2650 = scalar_lea.sflag [#allocation4], 1
    %2651 = vsyncpa %s2650, 1

</llo_original>
